<compile_context>
chip_gen: v6e
topology: v6e:2x2x1
jax: 0.10.0
libtpu: 0.0.40
codegen_flags: <defaults>
</compile_context>

<pallas_src>
import jax
import jax.numpy as jnp
from jax.experimental import pallas as pl


# ----------------------------------------------------------------------------
# Fused kernel: FCEstimator + (virtual concat) + fused ensemble + mean
# ----------------------------------------------------------------------------
def fused_retraining_kernel(
    # inputs
    x_ref, y_ref, ex_ref,
    # FCEstimator params
    fw1_ref, fb1_ref, fw2_ref, fb2_ref, fw3_ref, fb3_ref, fw4_ref, fb4_ref,
    # ensemble-fused OptiEstimator params
    w1f_ref, w1y_ref, w1e_ref, b1_ref,   # layer-1 lane-concat, W1 row-split
    w2_ref, b2_ref,                      # layer-2 block-diagonal
    w3_ref, b3_ref,                      # layer-3 block-diagonal
    w4_ref, b4_ref,                      # layer-4 stacked rows, pre-scaled 1/E
    # outputs
    fc_ref, op_ref):

  def dot(a, b):
    return jnp.dot(a, b, preferred_element_type=jnp.float32)

  # ---- FCEstimator backbone ----
  h = jnp.maximum(dot(x_ref[...], fw1_ref[...]) + fb1_ref[...], 0.0)
  h = jnp.maximum(dot(h, fw2_ref[...]) + fb2_ref[...], 0.0)
  h = jnp.maximum(dot(h, fw3_ref[...]) + fb3_ref[...], 0.0)
  fc = dot(h, fw4_ref[...]) + fb4_ref[...]
  fc_ref[...] = fc

  # ---- Ensemble of OptiEstimators, fully folded into fused weights ----
  # torch.cat((fc, y, exog), 1) is folded into the split W1 row blocks;
  # the E estimators are folded into lane-concat / block-diagonal weights.
  h1 = jnp.maximum(
      dot(fc, w1f_ref[...]) + dot(y_ref[...], w1y_ref[...])
      + dot(ex_ref[...], w1e_ref[...]) + b1_ref[...], 0.0)          # (B, E*128)
  h2 = jnp.maximum(dot(h1, w2_ref[...]) + b2_ref[...], 0.0)         # (B, E*64)
  h3 = jnp.maximum(dot(h2, w3_ref[...]) + b3_ref[...], 0.0)         # (B, E*32)
  # mean over estimators is already inside w4 (pre-scaled) and b4 (averaged)
  op_ref[...] = dot(h3, w4_ref[...]) + b4_ref[...]


# ----------------------------------------------------------------------------
# Wrapper
# ----------------------------------------------------------------------------
@jax.jit
def retraining_model_forward(x, y_batch, exog_batch, fc_params,
                             fused_opti_params):
  """Returns (fc, op_est) exactly like RetrainingModel.forward."""
  batch = x.shape[0]
  fc_out = fc_params[-1].shape[-1]
  opti_out = fused_opti_params[-1].shape[-1]

  # No grid: all inputs, weights and outputs fit in whole-array VMEM blocks
  # (< 1 MiB), so a single dispatch with no pipelining is optimal.
  fc, op_est = pl.pallas_call(
      fused_retraining_kernel,
      out_shape=(jax.ShapeDtypeStruct((batch, fc_out), jnp.float32),
                 jax.ShapeDtypeStruct((batch, opti_out), jnp.float32)),
  )(x, y_batch, exog_batch, *fc_params, *fused_opti_params)
  return fc, op_est


# ----------------------------------------------------------------------------
# One-time (offline) parameter fusion of the OptiEstimator ensemble
# ----------------------------------------------------------------------------
def _block_diag(blocks):
  rows = sum(b.shape[0] for b in blocks)
  cols = sum(b.shape[1] for b in blocks)
  out = jnp.zeros((rows, cols), blocks[0].dtype)
  r = c = 0
  for b in blocks:
    out = out.at[r:r + b.shape[0], c:c + b.shape[1]].set(b)
    r += b.shape[0]
    c += b.shape[1]
  return out


def fuse_opti_params(opti_params_list, fc_out, y_dim):
  """Fold the E-estimator ensemble (and the input concat and the final mean)
  into a single set of weights. Done once, before any forward passes."""
  E = len(opti_params_list)
  # layer 1: split rows into [fc | y | exog] blocks, concat estimators on lanes
  w1f = jnp.concatenate([p[0][:fc_out, :] for p in opti_params_list], axis=1)
  w1y = jnp.concatenate([p[0][fc_out:fc_out + y_dim, :]
                         for p in opti_params_list], axis=1)
  w1e = jnp.concatenate([p[0][fc_out + y_dim:, :]
                         for p in opti_params_list], axis=1)
  b1 = jnp.concatenate([p[1] for p in opti_params_list], axis=1)
  # layers 2 & 3: block-diagonal fusion (estimators stay independent)
  w2 = _block_diag([p[2] for p in opti_params_list])
  b2 = jnp.concatenate([p[3] for p in opti_params_list], axis=1)
  w3 = _block_diag([p[4] for p in opti_params_list])
  b3 = jnp.concatenate([p[5] for p in opti_params_list], axis=1)
  # layer 4 + mean over estimators: stack rows, pre-scale by 1/E, average bias
  w4 = jnp.concatenate([p[6] for p in opti_params_list], axis=0) / E
  b4 = sum(p[7] for p in opti_params_list) / E
  return (w1f, w1y, w1e, b1, w2, b2, w3, b3, w4, b4)


# ----------------------------------------------------------------------------
# Deterministic parameter construction (synthetic, not a checkpoint)
# ----------------------------------------------------------------------------
def make_mlp_params(key, in_dim, out_dim):
  dims = [in_dim, 128, 64, 32, out_dim]
  params = []
  for i in range(4):
    key, kw, kb = jax.random.split(key, 3)
    scale = 1.0 / jnp.sqrt(jnp.float32(dims[i]))
    w = jax.random.uniform(kw, (dims[i], dims[i + 1]), jnp.float32,
                           -scale, scale)
    b = jax.random.uniform(kb, (1, dims[i + 1]), jnp.float32, -scale, scale)
    params += [w, b]
  return tuple(params)


def mlp_ref(x, params):
  w1, b1, w2, b2, w3, b3, w4, b4 = params
  h = jnp.maximum(x @ w1 + b1, 0.0)
  h = jnp.maximum(h @ w2 + b2, 0.0)
  h = jnp.maximum(h @ w3 + b3, 0.0)
  return h @ w4 + b4


if __name__ == "__main__":
  # Shapes implied by the forward:
  #   input:       (B, input_size)
  #   y_batch:     (B, y_dim)
  #   exog_batch:  (B, exog_dim)
  #   FCEstimator:       input_size -> fc_out
  #   OptiEstimator_i:   (fc_out + y_dim + exog_dim) -> opti_out
  B, input_size, fc_out = 8, 16, 4
  y_dim, exog_dim, opti_out = 1, 3, 1
  num_estimators = 3

  root = jax.random.PRNGKey(0)
  k_in, k_y, k_ex, k_fc, k_op = jax.random.split(root, 5)

  x = jax.random.normal(k_in, (B, input_size), jnp.float32)
  y_batch = jax.random.normal(k_y, (B, y_dim), jnp.float32)
  exog_batch = jax.random.normal(k_ex, (B, exog_dim), jnp.float32)

  fc_params = make_mlp_params(k_fc, input_size, fc_out)

  opti_in = fc_out + y_dim + exog_dim
  opti_params_list = []
  for _ in range(num_estimators):
    k_op, ke = jax.random.split(k_op)
    opti_params_list.append(make_mlp_params(ke, opti_in, opti_out))

  # One-time offline fusion of the ensemble into a single weight set.
  fused_opti = fuse_opti_params(opti_params_list, fc_out, y_dim)
  fused_opti = jax.tree_util.tree_map(jax.block_until_ready, fused_opti)

  fc, op_est = retraining_model_forward(x, y_batch, exog_batch, fc_params,
                                        fused_opti)
  fc = jax.block_until_ready(fc)
  op_est = jax.block_until_ready(op_est)

  # Pure-JAX reference check (mirrors the PyTorch forward).
  fc_ref = mlp_ref(x, fc_params)
  input_op_ref = jnp.concatenate((fc_ref, y_batch, exog_batch), axis=1)
  op_ref = jnp.mean(
      jnp.stack([mlp_ref(input_op_ref, p) for p in opti_params_list]), axis=0)

  assert fc.shape == (B, fc_out) and op_est.shape == (B, opti_out)
  assert jnp.allclose(fc, fc_ref, atol=1e-5, rtol=1e-5)
  assert jnp.allclose(op_est, op_ref, atol=1e-5, rtol=1e-5)

  print("KERNEL_OK")
</pallas_src>

<mosaic_0001>
module attributes {stable_mosaic.version = 11 : i64} {
  func.func @fused_retraining_kernel(%arg0: memref<8x16xf32, #tpu.memory_space<vmem>>, %arg1: memref<8x1xf32, #tpu.memory_space<vmem>>, %arg2: memref<8x3xf32, #tpu.memory_space<vmem>>, %arg3: memref<16x128xf32, #tpu.memory_space<vmem>>, %arg4: memref<1x128xf32, #tpu.memory_space<vmem>>, %arg5: memref<128x64xf32, #tpu.memory_space<vmem>>, %arg6: memref<1x64xf32, #tpu.memory_space<vmem>>, %arg7: memref<64x32xf32, #tpu.memory_space<vmem>>, %arg8: memref<1x32xf32, #tpu.memory_space<vmem>>, %arg9: memref<32x4xf32, #tpu.memory_space<vmem>>, %arg10: memref<1x4xf32, #tpu.memory_space<vmem>>, %arg11: memref<4x384xf32, #tpu.memory_space<vmem>>, %arg12: memref<1x384xf32, #tpu.memory_space<vmem>>, %arg13: memref<3x384xf32, #tpu.memory_space<vmem>>, %arg14: memref<1x384xf32, #tpu.memory_space<vmem>>, %arg15: memref<384x192xf32, #tpu.memory_space<vmem>>, %arg16: memref<1x192xf32, #tpu.memory_space<vmem>>, %arg17: memref<192x96xf32, #tpu.memory_space<vmem>>, %arg18: memref<1x96xf32, #tpu.memory_space<vmem>>, %arg19: memref<96x1xf32, #tpu.memory_space<vmem>>, %arg20: memref<1x1xf32, #tpu.memory_space<vmem>>, %arg21: memref<8x4xf32, #tpu.memory_space<vmem>>, %arg22: memref<8x1xf32, #tpu.memory_space<vmem>>) attributes {dimension_semantics = [], scalar_prefetch = 0 : i64, scratch_operands = 0 : i64, tpu.core_type = #tpu.core_type<tc>} {
    %c0 = arith.constant 0 : index
    %c0_0 = arith.constant 0 : index
    %0 = vector.load %arg0[%c0, %c0_0] : memref<8x16xf32, #tpu.memory_space<vmem>>, vector<8x16xf32>
    %c0_1 = arith.constant 0 : index
    %c0_2 = arith.constant 0 : index
    %1 = vector.load %arg3[%c0_1, %c0_2] : memref<16x128xf32, #tpu.memory_space<vmem>>, vector<16x128xf32>
    %cst = arith.constant dense<0.000000e+00> : vector<8x128xf32>
    %2 = tpu.matmul %0, %1, %cst {dimension_numbers = #tpu.dot_dimension_numbers<[1], [0], [0], [1], [0, 0, 1, 1], [], []>} : vector<8x16xf32>, vector<16x128xf32>, vector<8x128xf32> -> vector<8x128xf32>
    %c0_3 = arith.constant 0 : index
    %c0_4 = arith.constant 0 : index
    %3 = vector.load %arg4[%c0_3, %c0_4] : memref<1x128xf32, #tpu.memory_space<vmem>>, vector<1x128xf32>
    %4 = vector.broadcast %3 : vector<1x128xf32> to vector<8x128xf32>
    %5 = arith.addf %2, %4 : vector<8x128xf32>
    %cst_5 = arith.constant 0.000000e+00 : f32
    %6 = vector.broadcast %cst_5 : f32 to vector<8x128xf32>
    %7 = arith.maximumf %5, %6 : vector<8x128xf32>
    %c0_6 = arith.constant 0 : index
    %c0_7 = arith.constant 0 : index
    %8 = vector.load %arg5[%c0_6, %c0_7] : memref<128x64xf32, #tpu.memory_space<vmem>>, vector<128x64xf32>
    %cst_8 = arith.constant dense<0.000000e+00> : vector<8x64xf32>
    %9 = tpu.matmul %7, %8, %cst_8 {dimension_numbers = #tpu.dot_dimension_numbers<[1], [0], [0], [1], [0, 0, 1, 1], [], []>} : vector<8x128xf32>, vector<128x64xf32>, vector<8x64xf32> -> vector<8x64xf32>
    %c0_9 = arith.constant 0 : index
    %c0_10 = arith.constant 0 : index
    %10 = vector.load %arg6[%c0_9, %c0_10] : memref<1x64xf32, #tpu.memory_space<vmem>>, vector<1x64xf32>
    %11 = vector.broadcast %10 : vector<1x64xf32> to vector<8x64xf32>
    %12 = arith.addf %9, %11 : vector<8x64xf32>
    %cst_11 = arith.constant 0.000000e+00 : f32
    %13 = vector.broadcast %cst_11 : f32 to vector<8x64xf32>
    %14 = arith.maximumf %12, %13 : vector<8x64xf32>
    %c0_12 = arith.constant 0 : index
    %c0_13 = arith.constant 0 : index
    %15 = vector.load %arg7[%c0_12, %c0_13] : memref<64x32xf32, #tpu.memory_space<vmem>>, vector<64x32xf32>
    %cst_14 = arith.constant dense<0.000000e+00> : vector<8x32xf32>
    %16 = tpu.matmul %14, %15, %cst_14 {dimension_numbers = #tpu.dot_dimension_numbers<[1], [0], [0], [1], [0, 0, 1, 1], [], []>} : vector<8x64xf32>, vector<64x32xf32>, vector<8x32xf32> -> vector<8x32xf32>
    %c0_15 = arith.constant 0 : index
    %c0_16 = arith.constant 0 : index
    %17 = vector.load %arg8[%c0_15, %c0_16] : memref<1x32xf32, #tpu.memory_space<vmem>>, vector<1x32xf32>
    %18 = vector.broadcast %17 : vector<1x32xf32> to vector<8x32xf32>
    %19 = arith.addf %16, %18 : vector<8x32xf32>
    %cst_17 = arith.constant 0.000000e+00 : f32
    %20 = vector.broadcast %cst_17 : f32 to vector<8x32xf32>
    %21 = arith.maximumf %19, %20 : vector<8x32xf32>
    %c0_18 = arith.constant 0 : index
    %c0_19 = arith.constant 0 : index
    %22 = vector.load %arg9[%c0_18, %c0_19] : memref<32x4xf32, #tpu.memory_space<vmem>>, vector<32x4xf32>
    %cst_20 = arith.constant dense<0.000000e+00> : vector<8x4xf32>
    %23 = tpu.matmul %21, %22, %cst_20 {dimension_numbers = #tpu.dot_dimension_numbers<[1], [0], [0], [1], [0, 0, 1, 1], [], []>} : vector<8x32xf32>, vector<32x4xf32>, vector<8x4xf32> -> vector<8x4xf32>
    %c0_21 = arith.constant 0 : index
    %c0_22 = arith.constant 0 : index
    %24 = vector.load %arg10[%c0_21, %c0_22] : memref<1x4xf32, #tpu.memory_space<vmem>>, vector<1x4xf32>
    %25 = vector.broadcast %24 : vector<1x4xf32> to vector<8x4xf32>
    %26 = arith.addf %23, %25 : vector<8x4xf32>
    %c0_23 = arith.constant 0 : index
    %c0_24 = arith.constant 0 : index
    %27 = vector.load %arg21[%c0_23, %c0_24] : memref<8x4xf32, #tpu.memory_space<vmem>>, vector<8x4xf32>
    tpu.vector_store %arg21[%c0_23, %c0_24], %26 {strides = array<i32>} : memref<8x4xf32, #tpu.memory_space<vmem>>, vector<8x4xf32>,
    %c0_25 = arith.constant 0 : index
    %c0_26 = arith.constant 0 : index
    %28 = vector.load %arg11[%c0_25, %c0_26] : memref<4x384xf32, #tpu.memory_space<vmem>>, vector<4x384xf32>
    %cst_27 = arith.constant dense<0.000000e+00> : vector<8x384xf32>
    %29 = tpu.matmul %26, %28, %cst_27 {dimension_numbers = #tpu.dot_dimension_numbers<[1], [0], [0], [1], [0, 0, 1, 1], [], []>} : vector<8x4xf32>, vector<4x384xf32>, vector<8x384xf32> -> vector<8x384xf32>
    %c0_28 = arith.constant 0 : index
    %c0_29 = arith.constant 0 : index
    %30 = vector.load %arg1[%c0_28, %c0_29] : memref<8x1xf32, #tpu.memory_space<vmem>>, vector<8x1xf32>
    %c0_30 = arith.constant 0 : index
    %c0_31 = arith.constant 0 : index
    %31 = vector.load %arg12[%c0_30, %c0_31] : memref<1x384xf32, #tpu.memory_space<vmem>>, vector<1x384xf32>
    %cst_32 = arith.constant dense<0.000000e+00> : vector<8x384xf32>
    %32 = tpu.matmul %30, %31, %cst_32 {dimension_numbers = #tpu.dot_dimension_numbers<[1], [0], [0], [1], [0, 0, 1, 1], [], []>} : vector<8x1xf32>, vector<1x384xf32>, vector<8x384xf32> -> vector<8x384xf32>
    %33 = arith.addf %29, %32 : vector<8x384xf32>
    %c0_33 = arith.constant 0 : index
    %c0_34 = arith.constant 0 : index
    %34 = vector.load %arg2[%c0_33, %c0_34] : memref<8x3xf32, #tpu.memory_space<vmem>>, vector<8x3xf32>
    %c0_35 = arith.constant 0 : index
    %c0_36 = arith.constant 0 : index
    %35 = vector.load %arg13[%c0_35, %c0_36] : memref<3x384xf32, #tpu.memory_space<vmem>>, vector<3x384xf32>
    %cst_37 = arith.constant dense<0.000000e+00> : vector<8x384xf32>
    %36 = tpu.matmul %34, %35, %cst_37 {dimension_numbers = #tpu.dot_dimension_numbers<[1], [0], [0], [1], [0, 0, 1, 1], [], []>} : vector<8x3xf32>, vector<3x384xf32>, vector<8x384xf32> -> vector<8x384xf32>
    %37 = arith.addf %33, %36 : vector<8x384xf32>
    %c0_38 = arith.constant 0 : index
    %c0_39 = arith.constant 0 : index
    %38 = vector.load %arg14[%c0_38, %c0_39] : memref<1x384xf32, #tpu.memory_space<vmem>>, vector<1x384xf32>
    %39 = vector.broadcast %38 : vector<1x384xf32> to vector<8x384xf32>
    %40 = arith.addf %37, %39 : vector<8x384xf32>
    %cst_40 = arith.constant 0.000000e+00 : f32
    %41 = vector.broadcast %cst_40 : f32 to vector<8x384xf32>
    %42 = arith.maximumf %40, %41 : vector<8x384xf32>
    %c0_41 = arith.constant 0 : index
    %c0_42 = arith.constant 0 : index
    %43 = vector.load %arg15[%c0_41, %c0_42] : memref<384x192xf32, #tpu.memory_space<vmem>>, vector<384x192xf32>
    %cst_43 = arith.constant dense<0.000000e+00> : vector<8x192xf32>
    %44 = tpu.matmul %42, %43, %cst_43 {dimension_numbers = #tpu.dot_dimension_numbers<[1], [0], [0], [1], [0, 0, 1, 1], [], []>} : vector<8x384xf32>, vector<384x192xf32>, vector<8x192xf32> -> vector<8x192xf32>
    %c0_44 = arith.constant 0 : index
    %c0_45 = arith.constant 0 : index
    %45 = vector.load %arg16[%c0_44, %c0_45] : memref<1x192xf32, #tpu.memory_space<vmem>>, vector<1x192xf32>
    %46 = vector.broadcast %45 : vector<1x192xf32> to vector<8x192xf32>
    %47 = arith.addf %44, %46 : vector<8x192xf32>
    %cst_46 = arith.constant 0.000000e+00 : f32
    %48 = vector.broadcast %cst_46 : f32 to vector<8x192xf32>
    %49 = arith.maximumf %47, %48 : vector<8x192xf32>
    %c0_47 = arith.constant 0 : index
    %c0_48 = arith.constant 0 : index
    %50 = vector.load %arg17[%c0_47, %c0_48] : memref<192x96xf32, #tpu.memory_space<vmem>>, vector<192x96xf32>
    %cst_49 = arith.constant dense<0.000000e+00> : vector<8x96xf32>
    %51 = tpu.matmul %49, %50, %cst_49 {dimension_numbers = #tpu.dot_dimension_numbers<[1], [0], [0], [1], [0, 0, 1, 1], [], []>} : vector<8x192xf32>, vector<192x96xf32>, vector<8x96xf32> -> vector<8x96xf32>
    %c0_50 = arith.constant 0 : index
    %c0_51 = arith.constant 0 : index
    %52 = vector.load %arg18[%c0_50, %c0_51] : memref<1x96xf32, #tpu.memory_space<vmem>>, vector<1x96xf32>
    %53 = vector.broadcast %52 : vector<1x96xf32> to vector<8x96xf32>
    %54 = arith.addf %51, %53 : vector<8x96xf32>
    %cst_52 = arith.constant 0.000000e+00 : f32
    %55 = vector.broadcast %cst_52 : f32 to vector<8x96xf32>
    %56 = arith.maximumf %54, %55 : vector<8x96xf32>
    %c0_53 = arith.constant 0 : index
    %c0_54 = arith.constant 0 : index
    %57 = vector.load %arg19[%c0_53, %c0_54] : memref<96x1xf32, #tpu.memory_space<vmem>>, vector<96x1xf32>
    %cst_55 = arith.constant dense<0.000000e+00> : vector<8x1xf32>
    %58 = tpu.matmul %56, %57, %cst_55 {dimension_numbers = #tpu.dot_dimension_numbers<[1], [0], [0], [1], [0, 0, 1, 1], [], []>} : vector<8x96xf32>, vector<96x1xf32>, vector<8x1xf32> -> vector<8x1xf32>
    %c0_56 = arith.constant 0 : index
    %c0_57 = arith.constant 0 : index
    %59 = vector.load %arg20[%c0_56, %c0_57] : memref<1x1xf32, #tpu.memory_space<vmem>>, vector<1x1xf32>
    %60 = vector.broadcast %59 : vector<1x1xf32> to vector<8x1xf32>
    %61 = arith.addf %58, %60 : vector<8x1xf32>
    %c0_58 = arith.constant 0 : index
    %c0_59 = arith.constant 0 : index
    %62 = vector.load %arg22[%c0_58, %c0_59] : memref<8x1xf32, #tpu.memory_space<vmem>>, vector<8x1xf32>
    tpu.vector_store %arg22[%c0_58, %c0_59], %61 {strides = array<i32>} : memref<8x1xf32, #tpu.memory_space<vmem>>, vector<8x1xf32>,
    return
  }
}

</mosaic_0001>

<llo_original>
// kernel: retraining_model_forward.1
$region0: #{retraining_model_forward.1}
  #allocation0 [shape = 'u32[]', space=smem, size = 0x4, offset = 0x4, fixed_abs, tag = 'smem constant byte address 0x4 - core index']
  #allocation1 [shape = 'u32[144,128]{1,0:T(1,128)}', space=vmem, size = 0x12000, scoped, tag = 'internal scratch']
  #allocation2 [shape = 'f32[1,1]{1,0:T(1,128)S(1)}', space=vmem, size = 0x200, scoped, tag = 'scoped memory for retraining_model_forward.1']
  %s0 = inlined_call_operand.vmem [shape: f32[8,16], index: 0, kind: input, shape index: {}]
  %s1 = inlined_call_operand.vmem [shape: f32[8,1], index: 1, kind: input, shape index: {}]
  %s2 = inlined_call_operand.vmem [shape: f32[8,3], index: 2, kind: input, shape index: {}]
  %s3 = inlined_call_operand.vmem [shape: f32[16,128], index: 3, kind: input, shape index: {}]
  %s4 = inlined_call_operand.vmem [shape: f32[1,128], index: 4, kind: input, shape index: {}]
  %s5 = inlined_call_operand.vmem [shape: f32[128,64], index: 5, kind: input, shape index: {}]
  %s6 = inlined_call_operand.vmem [shape: f32[1,64], index: 6, kind: input, shape index: {}]
  %s7 = inlined_call_operand.vmem [shape: f32[64,32], index: 7, kind: input, shape index: {}]
  %s8 = inlined_call_operand.vmem [shape: f32[1,32], index: 8, kind: input, shape index: {}]
  %s9 = inlined_call_operand.vmem [shape: f32[32,4], index: 9, kind: input, shape index: {}]
  %s10 = inlined_call_operand.vmem [shape: f32[1,4], index: 10, kind: input, shape index: {}]
  %s11 = inlined_call_operand.vmem [shape: f32[4,384], index: 11, kind: input, shape index: {}]
  %s12 = inlined_call_operand.vmem [shape: f32[1,384], index: 12, kind: input, shape index: {}]
  %s13 = inlined_call_operand.vmem [shape: f32[3,384], index: 13, kind: input, shape index: {}]
  %s14 = inlined_call_operand.vmem [shape: f32[1,384], index: 14, kind: input, shape index: {}]
  %s15 = inlined_call_operand.vmem [shape: f32[384,192], index: 15, kind: input, shape index: {}]
  %s16 = inlined_call_operand.vmem [shape: f32[1,192], index: 16, kind: input, shape index: {}]
  %s17 = inlined_call_operand.vmem [shape: f32[192,96], index: 17, kind: input, shape index: {}]
  %s18 = inlined_call_operand.vmem [shape: f32[1,96], index: 18, kind: input, shape index: {}]
  %s19 = inlined_call_operand.vmem [shape: f32[96,1], index: 19, kind: input, shape index: {}]
  %s20 = inlined_call_operand.<no memory space> [shape: f32[1,1], index: 20, kind: input, shape index: {}]
  %s21 = inlined_call_operand.vmem [shape: f32[8,4], index: 21, kind: output, shape index: {0}]
  %s22 = inlined_call_operand.vmem [shape: f32[8,1], index: 22, kind: output, shape index: {1}]
  %23 = xla_tuple %s21, %s22
  %s24 = sld [smem:[#allocation0]]
  $region102: #{retraining_model_forward.1} parent=0
    _
  %s26 = ssub.s32 1, %s24
  %s27 = scalar_select 0, %s26, %s24
  %v28 = vstv %s20
  %29 = vst [vmem:[#allocation2] sm:$0x1] %v28
  // Predicated region
  $region2: #{retraining_model_forward.1} parent=0 // pred_check
    _
  $region3: #{retraining_model_forward.1} parent=0 // pred_check_branch
    %31 = sbr.rel (0) target = $region5
  $region4: #{retraining_model_forward.1} parent=0 // pred_region
    _
  $region5: #{retraining_model_forward.1} parent=0 // pred_fallthru
    _
  // Predicated region
  $region6: #{retraining_model_forward.1} parent=0 // pred_check
    _
  $region7: #{retraining_model_forward.1} parent=0 // pred_check_branch
    %33 = sbr.rel (0) target = $region9
  $region8: #{retraining_model_forward.1} parent=0 // pred_region
    _
  $region9: #{retraining_model_forward.1} parent=0 // pred_fallthru
    _
  // Predicated region
  $region10: #{retraining_model_forward.1} parent=0 // pred_check
    _
  $region11: #{retraining_model_forward.1} parent=0 // pred_check_branch
    %35 = sbr.rel (0) target = $region13
  $region12: #{retraining_model_forward.1} parent=0 // pred_region
    _
  $region13: #{retraining_model_forward.1} parent=0 // pred_fallthru
    _
  // Predicated region
  $region14: #{retraining_model_forward.1} parent=0 // pred_check
    _
  $region15: #{retraining_model_forward.1} parent=0 // pred_check_branch
    %37 = sbr.rel (0) target = $region17
  $region16: #{retraining_model_forward.1} parent=0 // pred_region
    _
  $region17: #{retraining_model_forward.1} parent=0 // pred_fallthru
    _
  // Predicated region
  $region18: #{retraining_model_forward.1} parent=0 // pred_check
    _
  $region19: #{retraining_model_forward.1} parent=0 // pred_check_branch
    %39 = sbr.rel (0) target = $region21
  $region20: #{retraining_model_forward.1} parent=0 // pred_region
    _
  $region21: #{retraining_model_forward.1} parent=0 // pred_fallthru
    _
  // Predicated region
  $region22: #{retraining_model_forward.1} parent=0 // pred_check
    _
  $region23: #{retraining_model_forward.1} parent=0 // pred_check_branch
    %41 = sbr.rel (0) target = $region25
  $region24: #{retraining_model_forward.1} parent=0 // pred_region
    _
  $region25: #{retraining_model_forward.1} parent=0 // pred_fallthru
    _
  // Predicated region
  $region26: #{retraining_model_forward.1} parent=0 // pred_check
    _
  $region27: #{retraining_model_forward.1} parent=0 // pred_check_branch
    %43 = sbr.rel (0) target = $region29
  $region28: #{retraining_model_forward.1} parent=0 // pred_region
    _
  $region29: #{retraining_model_forward.1} parent=0 // pred_fallthru
    _
  // Predicated region
  $region30: #{retraining_model_forward.1} parent=0 // pred_check
    _
  $region31: #{retraining_model_forward.1} parent=0 // pred_check_branch
    %45 = sbr.rel (0) target = $region33
  $region32: #{retraining_model_forward.1} parent=0 // pred_region
    _
  $region33: #{retraining_model_forward.1} parent=0 // pred_fallthru
    _
  // Predicated region
  $region34: #{retraining_model_forward.1} parent=0 // pred_check
    _
  $region35: #{retraining_model_forward.1} parent=0 // pred_check_branch
    %47 = sbr.rel (0) target = $region37
  $region36: #{retraining_model_forward.1} parent=0 // pred_region
    _
  $region37: #{retraining_model_forward.1} parent=0 // pred_fallthru
    _
  // Predicated region
  $region38: #{retraining_model_forward.1} parent=0 // pred_check
    _
  $region39: #{retraining_model_forward.1} parent=0 // pred_check_branch
    %49 = sbr.rel (0) target = $region41
  $region40: #{retraining_model_forward.1} parent=0 // pred_region
    _
  $region41: #{retraining_model_forward.1} parent=0 // pred_fallthru
    _
  // Predicated region
  $region42: #{retraining_model_forward.1} parent=0 // pred_check
    _
  $region43: #{retraining_model_forward.1} parent=0 // pred_check_branch
    %51 = sbr.rel (0) target = $region45
  $region44: #{retraining_model_forward.1} parent=0 // pred_region
    _
  $region45: #{retraining_model_forward.1} parent=0 // pred_fallthru
    _
  // Predicated region
  $region46: #{retraining_model_forward.1} parent=0 // pred_check
    _
  $region47: #{retraining_model_forward.1} parent=0 // pred_check_branch
    %53 = sbr.rel (0) target = $region49
  $region48: #{retraining_model_forward.1} parent=0 // pred_region
    _
  $region49: #{retraining_model_forward.1} parent=0 // pred_fallthru
    _
  // Predicated region
  $region50: #{retraining_model_forward.1} parent=0 // pred_check
    _
  $region51: #{retraining_model_forward.1} parent=0 // pred_check_branch
    %55 = sbr.rel (0) target = $region53
  $region52: #{retraining_model_forward.1} parent=0 // pred_region
    _
  $region53: #{retraining_model_forward.1} parent=0 // pred_fallthru
    _
  // Predicated region
  $region54: #{retraining_model_forward.1} parent=0 // pred_check
    _
  $region55: #{retraining_model_forward.1} parent=0 // pred_check_branch
    %57 = sbr.rel (0) target = $region57
  $region56: #{retraining_model_forward.1} parent=0 // pred_region
    _
  $region57: #{retraining_model_forward.1} parent=0 // pred_fallthru
    _
  // Predicated region
  $region58: #{retraining_model_forward.1} parent=0 // pred_check
    _
  $region59: #{retraining_model_forward.1} parent=0 // pred_check_branch
    %59 = sbr.rel (0) target = $region61
  $region60: #{retraining_model_forward.1} parent=0 // pred_region
    _
  $region61: #{retraining_model_forward.1} parent=0 // pred_fallthru
    _
  // Predicated region
  $region62: #{retraining_model_forward.1} parent=0 // pred_check
    _
  $region63: #{retraining_model_forward.1} parent=0 // pred_check_branch
    %61 = sbr.rel (0) target = $region65
  $region64: #{retraining_model_forward.1} parent=0 // pred_region
    _
  $region65: #{retraining_model_forward.1} parent=0 // pred_fallthru
    _
  // Predicated region
  $region66: #{retraining_model_forward.1} parent=0 // pred_check
    _
  $region67: #{retraining_model_forward.1} parent=0 // pred_check_branch
    %63 = sbr.rel (0) target = $region69
  $region68: #{retraining_model_forward.1} parent=0 // pred_region
    _
  $region69: #{retraining_model_forward.1} parent=0 // pred_fallthru
    _
  // Predicated region
  $region70: #{retraining_model_forward.1} parent=0 // pred_check
    _
  $region71: #{retraining_model_forward.1} parent=0 // pred_check_branch
    %65 = sbr.rel (0) target = $region73
  $region72: #{retraining_model_forward.1} parent=0 // pred_region
    _
  $region73: #{retraining_model_forward.1} parent=0 // pred_fallthru
    _
  // Predicated region
  $region74: #{retraining_model_forward.1} parent=0 // pred_check
    _
  $region75: #{retraining_model_forward.1} parent=0 // pred_check_branch
    %67 = sbr.rel (0) target = $region77
  $region76: #{retraining_model_forward.1} parent=0 // pred_region
    _
  $region77: #{retraining_model_forward.1} parent=0 // pred_fallthru
    _
  // Predicated region
  $region78: #{retraining_model_forward.1} parent=0 // pred_check
    _
  $region79: #{retraining_model_forward.1} parent=0 // pred_check_branch
    %69 = sbr.rel (0) target = $region81
  $region80: #{retraining_model_forward.1} parent=0 // pred_region
    _
  $region81: #{retraining_model_forward.1} parent=0 // pred_fallthru
    _
  // Predicated region
  $region82: #{retraining_model_forward.1} parent=0 // pred_check
    _
  $region83: #{retraining_model_forward.1} parent=0 // pred_check_branch
    %71 = sbr.rel (0) target = $region85
  $region84: #{retraining_model_forward.1} parent=0 // pred_region
    _
  $region85: #{retraining_model_forward.1} parent=0 // pred_fallthru
    _
  %v72 = vld [vmem:[%s0] sm:$0xff]
  %v73 = vld [vmem:[%s3] sm:$0xff]
  %v74 = vld [vmem:[%s3 + $0x8] sm:$0xff]
  %v75 = vld [vmem:[%s4] sm:$0x1]
  %v77 = vlaneseq
  %v78 = vshrl.u32 %v77, 7
  %v79 = vsub.s32 0, %v78
  %v80 = vrot.slane %v75, %v79
  %vm82 = vcmask 130048
  %v84 = vsel %vm82, %v72, 0
  %86 = vmatprep.subr.mxu0 0.0
  %87 = vmatpush1.msra.mxu0 0.0
  %88 = vmatprep.subr.mxu0 0.0
  %89 = vmatpush1.msra.mxu0 0.0
  %90 = vmatprep.subr.mxu0 0.0
  %91 = vmatpush1.msra.mxu0 0.0
  %92 = vmatprep.subr.mxu0 0.0
  %93 = vmatpush1.msra.mxu0 0.0
  %94 = vmatprep.subr.mxu0 0.0
  %95 = vmatpush1.msra.mxu0 0.0
  %96 = vmatprep.subr.mxu0 0.0
  %97 = vmatpush1.msra.mxu0 0.0
  %98 = vmatprep.subr.mxu0 0.0
  %99 = vmatpush1.msra.mxu0 0.0
  %100 = vmatprep.subr.mxu0 0.0
  %101 = vmatpush1.msra.mxu0 0.0
  %102 = vmatprep.subr.mxu0 0.0
  %103 = vmatpush1.msra.mxu0 0.0
  %104 = vmatprep.subr.mxu0 0.0
  %105 = vmatpush1.msra.mxu0 0.0
  %106 = vmatprep.subr.mxu0 0.0
  %107 = vmatpush1.msra.mxu0 0.0
  %108 = vmatprep.subr.mxu0 0.0
  %109 = vmatpush1.msra.mxu0 0.0
  %110 = vmatprep.subr.mxu0 0.0
  %111 = vmatpush1.msra.mxu0 0.0
  %112 = vmatprep.subr.mxu0 0.0
  %113 = vmatpush1.msra.mxu0 0.0
  %114 = vmatprep.subr.mxu0 0.0
  %115 = vmatpush1.msra.mxu0 %v74
  %116 = vmatprep.subr.mxu0 0.0
  %117 = vmatpush1.msra.mxu0 %v73
  %118 = vmatprep.subr.mxu0 0.0
  %119 = vmatpush2.msra.mxu0 0.0
  %120 = vmatprep.subr.mxu0 0.0
  %121 = vmatpush2.msra.mxu0 0.0
  %122 = vmatprep.subr.mxu0 0.0
  %123 = vmatpush2.msra.mxu0 0.0
  %124 = vmatprep.subr.mxu0 0.0
  %125 = vmatpush2.msra.mxu0 0.0
  %126 = vmatprep.subr.mxu0 0.0
  %127 = vmatpush2.msra.mxu0 0.0
  %128 = vmatprep.subr.mxu0 0.0
  %129 = vmatpush2.msra.mxu0 0.0
  %130 = vmatprep.subr.mxu0 0.0
  %131 = vmatpush2.msra.mxu0 0.0
  %132 = vmatprep.subr.mxu0 0.0
  %133 = vmatpush2.msra.mxu0 0.0
  %134 = vmatprep.subr.mxu0 0.0
  %135 = vmatpush2.msra.mxu0 0.0
  %136 = vmatprep.subr.mxu0 0.0
  %137 = vmatpush2.msra.mxu0 0.0
  %138 = vmatprep.subr.mxu0 0.0
  %139 = vmatpush2.msra.mxu0 0.0
  %140 = vmatprep.subr.mxu0 0.0
  %141 = vmatpush2.msra.mxu0 0.0
  %142 = vmatprep.subr.mxu0 0.0
  %143 = vmatpush2.msra.mxu0 0.0
  %144 = vmatprep.subr.mxu0 0.0
  %145 = vmatpush2.msra.mxu0 0.0
  %146 = vmatprep.subr.mxu0 0.0
  %147 = vmatpush2.msra.mxu0 0.0
  %148 = vmatprep.subr.mxu0 0.0
  %149 = vmatpush2.msra.mxu0 0.0
  %150 = vmatprep.mubr.f32.mxu0 0.0
  %151 = vmatmul.mubr.f32.gmra.mxu0 %v84
  %v152 = vpop.f32.mrf.mxu0
  %v153 = vadd.f32 %v80, %v152
  %v154 = vpop.f32.mrf.mxu0
  %155 = vdwg.mxu0
  %v156 = vmax.f32 %v153, 0.0
  %v157 = vld [vmem:[%s5] sm:$0xff]
  %v158 = vld [vmem:[%s5 + $0x8] sm:$0xff]
  %v159 = vld [vmem:[%s5 + $0x10] sm:$0xff]
  %v160 = vld [vmem:[%s5 + $0x18] sm:$0xff]
  %v161 = vld [vmem:[%s5 + $0x20] sm:$0xff]
  %v162 = vld [vmem:[%s5 + $0x28] sm:$0xff]
  %v163 = vld [vmem:[%s5 + $0x30] sm:$0xff]
  %v164 = vld [vmem:[%s5 + $0x38] sm:$0xff]
  %v165 = vld [vmem:[%s5 + $0x40] sm:$0xff]
  %v166 = vld [vmem:[%s5 + $0x48] sm:$0xff]
  %v167 = vld [vmem:[%s5 + $0x50] sm:$0xff]
  %v168 = vld [vmem:[%s5 + $0x58] sm:$0xff]
  %v169 = vld [vmem:[%s5 + $0x60] sm:$0xff]
  %v170 = vld [vmem:[%s5 + $0x68] sm:$0xff]
  %v171 = vld [vmem:[%s5 + $0x70] sm:$0xff]
  %v172 = vld [vmem:[%s5 + $0x78] sm:$0xff]
  %v173 = vld [vmem:[%s6] sm:$0x1]
  %v175 = vlaneseq
  %v176 = vshrl.u32 %v175, 7
  %v177 = vsub.s32 0, %v176
  %v178 = vrot.slane %v173, %v177
  %180 = vmatprep.subr.mxu0 0.0
  %181 = vmatpush1.msra.mxu0 %v172
  %182 = vmatprep.subr.mxu0 0.0
  %183 = vmatpush1.msra.mxu0 %v171
  %184 = vmatprep.subr.mxu0 0.0
  %185 = vmatpush1.msra.mxu0 %v170
  %186 = vmatprep.subr.mxu0 0.0
  %187 = vmatpush1.msra.mxu0 %v169
  %188 = vmatprep.subr.mxu0 0.0
  %189 = vmatpush1.msra.mxu0 %v168
  %190 = vmatprep.subr.mxu0 0.0
  %191 = vmatpush1.msra.mxu0 %v167
  %192 = vmatprep.subr.mxu0 0.0
  %193 = vmatpush1.msra.mxu0 %v166
  %194 = vmatprep.subr.mxu0 0.0
  %195 = vmatpush1.msra.mxu0 %v165
  %196 = vmatprep.subr.mxu0 0.0
  %197 = vmatpush1.msra.mxu0 %v164
  %198 = vmatprep.subr.mxu0 0.0
  %199 = vmatpush1.msra.mxu0 %v163
  %200 = vmatprep.subr.mxu0 0.0
  %201 = vmatpush1.msra.mxu0 %v162
  %202 = vmatprep.subr.mxu0 0.0
  %203 = vmatpush1.msra.mxu0 %v161
  %204 = vmatprep.subr.mxu0 0.0
  %205 = vmatpush1.msra.mxu0 %v160
  %206 = vmatprep.subr.mxu0 0.0
  %207 = vmatpush1.msra.mxu0 %v159
  %208 = vmatprep.subr.mxu0 0.0
  %209 = vmatpush1.msra.mxu0 %v158
  %210 = vmatprep.subr.mxu0 0.0
  %211 = vmatpush1.msra.mxu0 %v157
  %212 = vmatprep.subr.mxu0 0.0
  %213 = vmatpush2.msra.mxu0 0.0
  %214 = vmatprep.subr.mxu0 0.0
  %215 = vmatpush2.msra.mxu0 0.0
  %216 = vmatprep.subr.mxu0 0.0
  %217 = vmatpush2.msra.mxu0 0.0
  %218 = vmatprep.subr.mxu0 0.0
  %219 = vmatpush2.msra.mxu0 0.0
  %220 = vmatprep.subr.mxu0 0.0
  %221 = vmatpush2.msra.mxu0 0.0
  %222 = vmatprep.subr.mxu0 0.0
  %223 = vmatpush2.msra.mxu0 0.0
  %224 = vmatprep.subr.mxu0 0.0
  %225 = vmatpush2.msra.mxu0 0.0
  %226 = vmatprep.subr.mxu0 0.0
  %227 = vmatpush2.msra.mxu0 0.0
  %228 = vmatprep.subr.mxu0 0.0
  %229 = vmatpush2.msra.mxu0 0.0
  %230 = vmatprep.subr.mxu0 0.0
  %231 = vmatpush2.msra.mxu0 0.0
  %232 = vmatprep.subr.mxu0 0.0
  %233 = vmatpush2.msra.mxu0 0.0
  %234 = vmatprep.subr.mxu0 0.0
  %235 = vmatpush2.msra.mxu0 0.0
  %236 = vmatprep.subr.mxu0 0.0
  %237 = vmatpush2.msra.mxu0 0.0
  %238 = vmatprep.subr.mxu0 0.0
  %239 = vmatpush2.msra.mxu0 0.0
  %240 = vmatprep.subr.mxu0 0.0
  %241 = vmatpush2.msra.mxu0 0.0
  %242 = vmatprep.subr.mxu0 0.0
  %243 = vmatpush2.msra.mxu0 0.0
  %244 = vmatprep.mubr.f32.mxu0 0.0
  %245 = vmatmul.mubr.f32.gmra.mxu0 %v156
  %v246 = vpop.f32.mrf.mxu0
  %v247 = vadd.f32 %v178, %v246
  %v248 = vpop.f32.mrf.mxu0
  %249 = vdwg.mxu0
  %v250 = vmax.f32 %v247, 0.0
  %v251 = vld [vmem:[%s7] sm:$0xff]
  %v252 = vld [vmem:[%s7 + $0x8] sm:$0xff]
  %v253 = vld [vmem:[%s7 + $0x10] sm:$0xff]
  %v254 = vld [vmem:[%s7 + $0x18] sm:$0xff]
  %v255 = vld [vmem:[%s7 + $0x20] sm:$0xff]
  %v256 = vld [vmem:[%s7 + $0x28] sm:$0xff]
  %v257 = vld [vmem:[%s7 + $0x30] sm:$0xff]
  %v258 = vld [vmem:[%s7 + $0x38] sm:$0xff]
  %v259 = vld [vmem:[%s8] sm:$0x1]
  %v261 = vlaneseq
  %v262 = vshrl.u32 %v261, 7
  %v263 = vsub.s32 0, %v262
  %v264 = vrot.slane %v259, %v263
  %vm266 = vcmask 523264
  %v268 = vsel %vm266, %v250, 0
  %270 = vmatprep.subr.mxu0 0.0
  %271 = vmatpush1.msra.mxu0 0.0
  %272 = vmatprep.subr.mxu0 0.0
  %273 = vmatpush1.msra.mxu0 0.0
  %274 = vmatprep.subr.mxu0 0.0
  %275 = vmatpush1.msra.mxu0 0.0
  %276 = vmatprep.subr.mxu0 0.0
  %277 = vmatpush1.msra.mxu0 0.0
  %278 = vmatprep.subr.mxu0 0.0
  %279 = vmatpush1.msra.mxu0 0.0
  %280 = vmatprep.subr.mxu0 0.0
  %281 = vmatpush1.msra.mxu0 0.0
  %282 = vmatprep.subr.mxu0 0.0
  %283 = vmatpush1.msra.mxu0 0.0
  %284 = vmatprep.subr.mxu0 0.0
  %285 = vmatpush1.msra.mxu0 0.0
  %286 = vmatprep.subr.mxu0 0.0
  %287 = vmatpush1.msra.mxu0 %v258
  %288 = vmatprep.subr.mxu0 0.0
  %289 = vmatpush1.msra.mxu0 %v257
  %290 = vmatprep.subr.mxu0 0.0
  %291 = vmatpush1.msra.mxu0 %v256
  %292 = vmatprep.subr.mxu0 0.0
  %293 = vmatpush1.msra.mxu0 %v255
  %294 = vmatprep.subr.mxu0 0.0
  %295 = vmatpush1.msra.mxu0 %v254
  %296 = vmatprep.subr.mxu0 0.0
  %297 = vmatpush1.msra.mxu0 %v253
  %298 = vmatprep.subr.mxu0 0.0
  %299 = vmatpush1.msra.mxu0 %v252
  %300 = vmatprep.subr.mxu0 0.0
  %301 = vmatpush1.msra.mxu0 %v251
  %302 = vmatprep.subr.mxu0 0.0
  %303 = vmatpush2.msra.mxu0 0.0
  %304 = vmatprep.subr.mxu0 0.0
  %305 = vmatpush2.msra.mxu0 0.0
  %306 = vmatprep.subr.mxu0 0.0
  %307 = vmatpush2.msra.mxu0 0.0
  %308 = vmatprep.subr.mxu0 0.0
  %309 = vmatpush2.msra.mxu0 0.0
  %310 = vmatprep.subr.mxu0 0.0
  %311 = vmatpush2.msra.mxu0 0.0
  %312 = vmatprep.subr.mxu0 0.0
  %313 = vmatpush2.msra.mxu0 0.0
  %314 = vmatprep.subr.mxu0 0.0
  %315 = vmatpush2.msra.mxu0 0.0
  %316 = vmatprep.subr.mxu0 0.0
  %317 = vmatpush2.msra.mxu0 0.0
  %318 = vmatprep.subr.mxu0 0.0
  %319 = vmatpush2.msra.mxu0 0.0
  %320 = vmatprep.subr.mxu0 0.0
  %321 = vmatpush2.msra.mxu0 0.0
  %322 = vmatprep.subr.mxu0 0.0
  %323 = vmatpush2.msra.mxu0 0.0
  %324 = vmatprep.subr.mxu0 0.0
  %325 = vmatpush2.msra.mxu0 0.0
  %326 = vmatprep.subr.mxu0 0.0
  %327 = vmatpush2.msra.mxu0 0.0
  %328 = vmatprep.subr.mxu0 0.0
  %329 = vmatpush2.msra.mxu0 0.0
  %330 = vmatprep.subr.mxu0 0.0
  %331 = vmatpush2.msra.mxu0 0.0
  %332 = vmatprep.subr.mxu0 0.0
  %333 = vmatpush2.msra.mxu0 0.0
  %334 = vmatprep.mubr.f32.mxu0 0.0
  %335 = vmatmul.mubr.f32.gmra.mxu0 %v268
  %v336 = vpop.f32.mrf.mxu0
  %v337 = vadd.f32 %v264, %v336
  %v338 = vpop.f32.mrf.mxu0
  %339 = vdwg.mxu0
  %v340 = vmax.f32 %v337, 0.0
  %v341 = vld [vmem:[%s9] sm:$0xff]
  %v342 = vld [vmem:[%s9 + $0x8] sm:$0xff]
  %v343 = vld [vmem:[%s9 + $0x10] sm:$0xff]
  %v344 = vld [vmem:[%s9 + $0x18] sm:$0xff]
  %v345 = vld [vmem:[%s10] sm:$0x1]
  %v347 = vlaneseq
  %v348 = vshrl.u32 %v347, 7
  %v349 = vsub.s32 0, %v348
  %v350 = vrot.slane %v345, %v349
  %vm352 = vcmask 261120
  %v354 = vsel %vm352, %v340, 0
  %356 = vmatprep.subr.mxu0 0.0
  %357 = vmatpush1.msra.mxu0 0.0
  %358 = vmatprep.subr.mxu0 0.0
  %359 = vmatpush1.msra.mxu0 0.0
  %360 = vmatprep.subr.mxu0 0.0
  %361 = vmatpush1.msra.mxu0 0.0
  %362 = vmatprep.subr.mxu0 0.0
  %363 = vmatpush1.msra.mxu0 0.0
  %364 = vmatprep.subr.mxu0 0.0
  %365 = vmatpush1.msra.mxu0 0.0
  %366 = vmatprep.subr.mxu0 0.0
  %367 = vmatpush1.msra.mxu0 0.0
  %368 = vmatprep.subr.mxu0 0.0
  %369 = vmatpush1.msra.mxu0 0.0
  %370 = vmatprep.subr.mxu0 0.0
  %371 = vmatpush1.msra.mxu0 0.0
  %372 = vmatprep.subr.mxu0 0.0
  %373 = vmatpush1.msra.mxu0 0.0
  %374 = vmatprep.subr.mxu0 0.0
  %375 = vmatpush1.msra.mxu0 0.0
  %376 = vmatprep.subr.mxu0 0.0
  %377 = vmatpush1.msra.mxu0 0.0
  %378 = vmatprep.subr.mxu0 0.0
  %379 = vmatpush1.msra.mxu0 0.0
  %380 = vmatprep.subr.mxu0 0.0
  %381 = vmatpush1.msra.mxu0 %v344
  %382 = vmatprep.subr.mxu0 0.0
  %383 = vmatpush1.msra.mxu0 %v343
  %384 = vmatprep.subr.mxu0 0.0
  %385 = vmatpush1.msra.mxu0 %v342
  %386 = vmatprep.subr.mxu0 0.0
  %387 = vmatpush1.msra.mxu0 %v341
  %388 = vmatprep.subr.mxu0 0.0
  %389 = vmatpush2.msra.mxu0 0.0
  %390 = vmatprep.subr.mxu0 0.0
  %391 = vmatpush2.msra.mxu0 0.0
  %392 = vmatprep.subr.mxu0 0.0
  %393 = vmatpush2.msra.mxu0 0.0
  %394 = vmatprep.subr.mxu0 0.0
  %395 = vmatpush2.msra.mxu0 0.0
  %396 = vmatprep.subr.mxu0 0.0
  %397 = vmatpush2.msra.mxu0 0.0
  %398 = vmatprep.subr.mxu0 0.0
  %399 = vmatpush2.msra.mxu0 0.0
  %400 = vmatprep.subr.mxu0 0.0
  %401 = vmatpush2.msra.mxu0 0.0
  %402 = vmatprep.subr.mxu0 0.0
  %403 = vmatpush2.msra.mxu0 0.0
  %404 = vmatprep.subr.mxu0 0.0
  %405 = vmatpush2.msra.mxu0 0.0
  %406 = vmatprep.subr.mxu0 0.0
  %407 = vmatpush2.msra.mxu0 0.0
  %408 = vmatprep.subr.mxu0 0.0
  %409 = vmatpush2.msra.mxu0 0.0
  %410 = vmatprep.subr.mxu0 0.0
  %411 = vmatpush2.msra.mxu0 0.0
  %412 = vmatprep.subr.mxu0 0.0
  %413 = vmatpush2.msra.mxu0 0.0
  %414 = vmatprep.subr.mxu0 0.0
  %415 = vmatpush2.msra.mxu0 0.0
  %416 = vmatprep.subr.mxu0 0.0
  %417 = vmatpush2.msra.mxu0 0.0
  %418 = vmatprep.subr.mxu0 0.0
  %419 = vmatpush2.msra.mxu0 0.0
  %420 = vmatprep.mubr.f32.mxu0 0.0
  %421 = vmatmul.mubr.f32.gmra.mxu0 %v354
  %v422 = vpop.f32.mrf.mxu0
  %v423 = vadd.f32 %v350, %v422
  %v424 = vpop.f32.mrf.mxu0
  %425 = vdwg.mxu0
  %vm426 = vcmask 31744
  %427 = vst.msk [vmem:[%s21] sm:$0xff] %vm426, %v423
  %v428 = vld [vmem:[%s11] sm:$0xff]
  %v429 = vld [vmem:[%s11 + $0x8] sm:$0xf]
  %v430 = vld [vmem:[%s1] sm:$0xff]
  %v431 = vld [vmem:[%s12] sm:$0x7]
  %v433 = vlaneseq
  %v434 = vshrl.u32 %v433, 7
  %v435 = vsub.s32 0, %v434
  %v436 = vrot.slane %v431, %v435
  %v437 = vlaneseq
  %v438 = vshrl.u32 %v437, 7
  %v439 = vsub.s32 1, %v438
  %v440 = vrot.slane %v431, %v439
  %v441 = vlaneseq
  %v442 = vshrl.u32 %v441, 7
  %v443 = vsub.s32 2, %v442
  %v444 = vrot.slane %v431, %v443
  %vm445 = vcmask 7168
  %v447 = vsel %vm445, %v430, 0
  %vm449 = vcmask 1040384
  %v450 = vsel %vm449, %v436, 0
  %v452 = vsel %vm449, %v440, 0
  %v454 = vsel %vm449, %v444, 0
  %456 = vmatprep.subr.mxu0 0.0
  %457 = vmatpush1.msra.mxu0 0.0
  %458 = vmatprep.subr.mxu0 0.0
  %459 = vmatpush1.msra.mxu0 0.0
  %460 = vmatprep.subr.mxu0 0.0
  %461 = vmatpush1.msra.mxu0 0.0
  %462 = vmatprep.subr.mxu0 0.0
  %463 = vmatpush1.msra.mxu0 0.0
  %464 = vmatprep.subr.mxu0 0.0
  %465 = vmatpush1.msra.mxu0 0.0
  %466 = vmatprep.subr.mxu0 0.0
  %467 = vmatpush1.msra.mxu0 0.0
  %468 = vmatprep.subr.mxu0 0.0
  %469 = vmatpush1.msra.mxu0 0.0
  %470 = vmatprep.subr.mxu0 0.0
  %471 = vmatpush1.msra.mxu0 0.0
  %472 = vmatprep.subr.mxu0 0.0
  %473 = vmatpush1.msra.mxu0 0.0
  %474 = vmatprep.subr.mxu0 0.0
  %475 = vmatpush1.msra.mxu0 0.0
  %476 = vmatprep.subr.mxu0 0.0
  %477 = vmatpush1.msra.mxu0 0.0
  %478 = vmatprep.subr.mxu0 0.0
  %479 = vmatpush1.msra.mxu0 0.0
  %480 = vmatprep.subr.mxu0 0.0
  %481 = vmatpush1.msra.mxu0 0.0
  %482 = vmatprep.subr.mxu0 0.0
  %483 = vmatpush1.msra.mxu0 0.0
  %484 = vmatprep.subr.mxu0 0.0
  %485 = vmatpush1.msra.mxu0 0.0
  %486 = vmatprep.subr.mxu0 %v452
  %487 = vmatpush1.msra.mxu0 %v450
  %488 = vmatprep.subr.mxu0 0.0
  %489 = vmatpush2.msra.mxu0 0.0
  %490 = vmatprep.subr.mxu0 0.0
  %491 = vmatpush2.msra.mxu0 0.0
  %492 = vmatprep.subr.mxu0 0.0
  %493 = vmatpush2.msra.mxu0 0.0
  %494 = vmatprep.subr.mxu0 0.0
  %495 = vmatpush2.msra.mxu0 0.0
  %496 = vmatprep.subr.mxu0 0.0
  %497 = vmatpush2.msra.mxu0 0.0
  %498 = vmatprep.subr.mxu0 0.0
  %499 = vmatpush2.msra.mxu0 0.0
  %500 = vmatprep.subr.mxu0 0.0
  %501 = vmatpush2.msra.mxu0 0.0
  %502 = vmatprep.subr.mxu0 0.0
  %503 = vmatpush2.msra.mxu0 0.0
  %504 = vmatprep.subr.mxu0 0.0
  %505 = vmatpush2.msra.mxu0 0.0
  %506 = vmatprep.subr.mxu0 0.0
  %507 = vmatpush2.msra.mxu0 0.0
  %508 = vmatprep.subr.mxu0 0.0
  %509 = vmatpush2.msra.mxu0 0.0
  %510 = vmatprep.subr.mxu0 0.0
  %511 = vmatpush2.msra.mxu0 0.0
  %512 = vmatprep.subr.mxu0 0.0
  %513 = vmatpush2.msra.mxu0 0.0
  %514 = vmatprep.subr.mxu0 0.0
  %515 = vmatpush2.msra.mxu0 0.0
  %516 = vmatprep.subr.mxu0 0.0
  %517 = vmatpush2.msra.mxu0 0.0
  %518 = vmatprep.subr.mxu0 0.0
  %519 = vmatpush2.msra.mxu0 0.0
  %520 = vmatprep.mubr.f32.mxu0 0.0
  %521 = vmatmul.mubr.f32.gmra.mxu0 %v447
  %v522 = vpop.f32.mrf.mxu0
  %v523 = vadd.f32 0.0, %v522
  %v524 = vpop.f32.mrf.mxu0
  %v525 = vadd.f32 0.0, %v524
  %526 = vdwg.mxu0
  %527 = vmatprep.subr.mxu0 0.0
  %528 = vmatpush1.msra.mxu0 0.0
  %529 = vmatprep.subr.mxu0 0.0
  %530 = vmatpush1.msra.mxu0 0.0
  %531 = vmatprep.subr.mxu0 0.0
  %532 = vmatpush1.msra.mxu0 0.0
  %533 = vmatprep.subr.mxu0 0.0
  %534 = vmatpush1.msra.mxu0 0.0
  %535 = vmatprep.subr.mxu0 0.0
  %536 = vmatpush1.msra.mxu0 0.0
  %537 = vmatprep.subr.mxu0 0.0
  %538 = vmatpush1.msra.mxu0 0.0
  %539 = vmatprep.subr.mxu0 0.0
  %540 = vmatpush1.msra.mxu0 0.0
  %541 = vmatprep.subr.mxu0 0.0
  %542 = vmatpush1.msra.mxu0 0.0
  %543 = vmatprep.subr.mxu0 0.0
  %544 = vmatpush1.msra.mxu0 0.0
  %545 = vmatprep.subr.mxu0 0.0
  %546 = vmatpush1.msra.mxu0 0.0
  %547 = vmatprep.subr.mxu0 0.0
  %548 = vmatpush1.msra.mxu0 0.0
  %549 = vmatprep.subr.mxu0 0.0
  %550 = vmatpush1.msra.mxu0 0.0
  %551 = vmatprep.subr.mxu0 0.0
  %552 = vmatpush1.msra.mxu0 0.0
  %553 = vmatprep.subr.mxu0 0.0
  %554 = vmatpush1.msra.mxu0 0.0
  %555 = vmatprep.subr.mxu0 0.0
  %556 = vmatpush1.msra.mxu0 0.0
  %557 = vmatprep.subr.mxu0 0.0
  %558 = vmatpush1.msra.mxu0 %v454
  %559 = vmatprep.subr.mxu0 0.0
  %560 = vmatpush2.msra.mxu0 0.0
  %561 = vmatprep.subr.mxu0 0.0
  %562 = vmatpush2.msra.mxu0 0.0
  %563 = vmatprep.subr.mxu0 0.0
  %564 = vmatpush2.msra.mxu0 0.0
  %565 = vmatprep.subr.mxu0 0.0
  %566 = vmatpush2.msra.mxu0 0.0
  %567 = vmatprep.subr.mxu0 0.0
  %568 = vmatpush2.msra.mxu0 0.0
  %569 = vmatprep.subr.mxu0 0.0
  %570 = vmatpush2.msra.mxu0 0.0
  %571 = vmatprep.subr.mxu0 0.0
  %572 = vmatpush2.msra.mxu0 0.0
  %573 = vmatprep.subr.mxu0 0.0
  %574 = vmatpush2.msra.mxu0 0.0
  %575 = vmatprep.subr.mxu0 0.0
  %576 = vmatpush2.msra.mxu0 0.0
  %577 = vmatprep.subr.mxu0 0.0
  %578 = vmatpush2.msra.mxu0 0.0
  %579 = vmatprep.subr.mxu0 0.0
  %580 = vmatpush2.msra.mxu0 0.0
  %581 = vmatprep.subr.mxu0 0.0
  %582 = vmatpush2.msra.mxu0 0.0
  %583 = vmatprep.subr.mxu0 0.0
  %584 = vmatpush2.msra.mxu0 0.0
  %585 = vmatprep.subr.mxu0 0.0
  %586 = vmatpush2.msra.mxu0 0.0
  %587 = vmatprep.subr.mxu0 0.0
  %588 = vmatpush2.msra.mxu0 0.0
  %589 = vmatprep.subr.mxu0 0.0
  %590 = vmatpush2.msra.mxu0 0.0
  %591 = vmatprep.mubr.f32.mxu0 0.0
  %592 = vmatmul.mubr.f32.gmra.mxu0 %v447
  %v593 = vpop.f32.mrf.mxu0
  %v594 = vadd.f32 0.0, %v593
  %v595 = vpop.f32.mrf.mxu0
  %596 = vdwg.mxu0
  %v599 = vcombine.high %v428, %v428
  %v601 = vsel %vm426, %v423, 0
  %vm603 = vcmask 1043456
  %v604 = vsel %vm603, %v428, 0
  %v606 = vsel %vm603, %v599, 0
  %v608 = vsel %vm603, %v429, 0
  %610 = vmatprep.subr.mxu0 0.0
  %611 = vmatpush1.msra.mxu0 0.0
  %612 = vmatprep.subr.mxu0 0.0
  %613 = vmatpush1.msra.mxu0 0.0
  %614 = vmatprep.subr.mxu0 0.0
  %615 = vmatpush1.msra.mxu0 0.0
  %616 = vmatprep.subr.mxu0 0.0
  %617 = vmatpush1.msra.mxu0 0.0
  %618 = vmatprep.subr.mxu0 0.0
  %619 = vmatpush1.msra.mxu0 0.0
  %620 = vmatprep.subr.mxu0 0.0
  %621 = vmatpush1.msra.mxu0 0.0
  %622 = vmatprep.subr.mxu0 0.0
  %623 = vmatpush1.msra.mxu0 0.0
  %624 = vmatprep.subr.mxu0 0.0
  %625 = vmatpush1.msra.mxu0 0.0
  %626 = vmatprep.subr.mxu0 0.0
  %627 = vmatpush1.msra.mxu0 0.0
  %628 = vmatprep.subr.mxu0 0.0
  %629 = vmatpush1.msra.mxu0 0.0
  %630 = vmatprep.subr.mxu0 0.0
  %631 = vmatpush1.msra.mxu0 0.0
  %632 = vmatprep.subr.mxu0 0.0
  %633 = vmatpush1.msra.mxu0 0.0
  %634 = vmatprep.subr.mxu0 0.0
  %635 = vmatpush1.msra.mxu0 0.0
  %636 = vmatprep.subr.mxu0 0.0
  %637 = vmatpush1.msra.mxu0 0.0
  %638 = vmatprep.subr.mxu0 0.0
  %639 = vmatpush1.msra.mxu0 0.0
  %640 = vmatprep.subr.mxu0 %v606
  %641 = vmatpush1.msra.mxu0 %v604
  %642 = vmatprep.subr.mxu0 0.0
  %643 = vmatpush2.msra.mxu0 0.0
  %644 = vmatprep.subr.mxu0 0.0
  %645 = vmatpush2.msra.mxu0 0.0
  %646 = vmatprep.subr.mxu0 0.0
  %647 = vmatpush2.msra.mxu0 0.0
  %648 = vmatprep.subr.mxu0 0.0
  %649 = vmatpush2.msra.mxu0 0.0
  %650 = vmatprep.subr.mxu0 0.0
  %651 = vmatpush2.msra.mxu0 0.0
  %652 = vmatprep.subr.mxu0 0.0
  %653 = vmatpush2.msra.mxu0 0.0
  %654 = vmatprep.subr.mxu0 0.0
  %655 = vmatpush2.msra.mxu0 0.0
  %656 = vmatprep.subr.mxu0 0.0
  %657 = vmatpush2.msra.mxu0 0.0
  %658 = vmatprep.subr.mxu0 0.0
  %659 = vmatpush2.msra.mxu0 0.0
  %660 = vmatprep.subr.mxu0 0.0
  %661 = vmatpush2.msra.mxu0 0.0
  %662 = vmatprep.subr.mxu0 0.0
  %663 = vmatpush2.msra.mxu0 0.0
  %664 = vmatprep.subr.mxu0 0.0
  %665 = vmatpush2.msra.mxu0 0.0
  %666 = vmatprep.subr.mxu0 0.0
  %667 = vmatpush2.msra.mxu0 0.0
  %668 = vmatprep.subr.mxu0 0.0
  %669 = vmatpush2.msra.mxu0 0.0
  %670 = vmatprep.subr.mxu0 0.0
  %671 = vmatpush2.msra.mxu0 0.0
  %672 = vmatprep.subr.mxu0 0.0
  %673 = vmatpush2.msra.mxu0 0.0
  %674 = vmatprep.mubr.f32.mxu0 0.0
  %675 = vmatmul.mubr.f32.gmra.mxu0 %v601
  %v676 = vpop.f32.mrf.mxu0
  %v677 = vadd.f32 %v523, %v676
  %v678 = vpop.f32.mrf.mxu0
  %v679 = vadd.f32 %v525, %v678
  %680 = vdwg.mxu0
  %681 = vmatprep.subr.mxu0 0.0
  %682 = vmatpush1.msra.mxu0 0.0
  %683 = vmatprep.subr.mxu0 0.0
  %684 = vmatpush1.msra.mxu0 0.0
  %685 = vmatprep.subr.mxu0 0.0
  %686 = vmatpush1.msra.mxu0 0.0
  %687 = vmatprep.subr.mxu0 0.0
  %688 = vmatpush1.msra.mxu0 0.0
  %689 = vmatprep.subr.mxu0 0.0
  %690 = vmatpush1.msra.mxu0 0.0
  %691 = vmatprep.subr.mxu0 0.0
  %692 = vmatpush1.msra.mxu0 0.0
  %693 = vmatprep.subr.mxu0 0.0
  %694 = vmatpush1.msra.mxu0 0.0
  %695 = vmatprep.subr.mxu0 0.0
  %696 = vmatpush1.msra.mxu0 0.0
  %697 = vmatprep.subr.mxu0 0.0
  %698 = vmatpush1.msra.mxu0 0.0
  %699 = vmatprep.subr.mxu0 0.0
  %700 = vmatpush1.msra.mxu0 0.0
  %701 = vmatprep.subr.mxu0 0.0
  %702 = vmatpush1.msra.mxu0 0.0
  %703 = vmatprep.subr.mxu0 0.0
  %704 = vmatpush1.msra.mxu0 0.0
  %705 = vmatprep.subr.mxu0 0.0
  %706 = vmatpush1.msra.mxu0 0.0
  %707 = vmatprep.subr.mxu0 0.0
  %708 = vmatpush1.msra.mxu0 0.0
  %709 = vmatprep.subr.mxu0 0.0
  %710 = vmatpush1.msra.mxu0 0.0
  %711 = vmatprep.subr.mxu0 0.0
  %712 = vmatpush1.msra.mxu0 %v608
  %713 = vmatprep.subr.mxu0 0.0
  %714 = vmatpush2.msra.mxu0 0.0
  %715 = vmatprep.subr.mxu0 0.0
  %716 = vmatpush2.msra.mxu0 0.0
  %717 = vmatprep.subr.mxu0 0.0
  %718 = vmatpush2.msra.mxu0 0.0
  %719 = vmatprep.subr.mxu0 0.0
  %720 = vmatpush2.msra.mxu0 0.0
  %721 = vmatprep.subr.mxu0 0.0
  %722 = vmatpush2.msra.mxu0 0.0
  %723 = vmatprep.subr.mxu0 0.0
  %724 = vmatpush2.msra.mxu0 0.0
  %725 = vmatprep.subr.mxu0 0.0
  %726 = vmatpush2.msra.mxu0 0.0
  %727 = vmatprep.subr.mxu0 0.0
  %728 = vmatpush2.msra.mxu0 0.0
  %729 = vmatprep.subr.mxu0 0.0
  %730 = vmatpush2.msra.mxu0 0.0
  %731 = vmatprep.subr.mxu0 0.0
  %732 = vmatpush2.msra.mxu0 0.0
  %733 = vmatprep.subr.mxu0 0.0
  %734 = vmatpush2.msra.mxu0 0.0
  %735 = vmatprep.subr.mxu0 0.0
  %736 = vmatpush2.msra.mxu0 0.0
  %737 = vmatprep.subr.mxu0 0.0
  %738 = vmatpush2.msra.mxu0 0.0
  %739 = vmatprep.subr.mxu0 0.0
  %740 = vmatpush2.msra.mxu0 0.0
  %741 = vmatprep.subr.mxu0 0.0
  %742 = vmatpush2.msra.mxu0 0.0
  %743 = vmatprep.subr.mxu0 0.0
  %744 = vmatpush2.msra.mxu0 0.0
  %745 = vmatprep.mubr.f32.mxu0 0.0
  %746 = vmatmul.mubr.f32.gmra.mxu0 %v601
  %v747 = vpop.f32.mrf.mxu0
  %v748 = vadd.f32 %v594, %v747
  %v749 = vpop.f32.mrf.mxu0
  %750 = vdwg.mxu0
  %v751 = vld [vmem:[%s2] sm:$0xff]
  %v752 = vld [vmem:[%s13] sm:$0x77]
  %v753 = vld [vmem:[%s13 + $0x8] sm:$0x7]
  %v756 = vcombine.high %v752, %v752
  %vm757 = vcmask 23552
  %v759 = vsel %vm757, %v751, 0
  %vm761 = vcmask 1042432
  %v762 = vsel %vm761, %v752, 0
  %v764 = vsel %vm761, %v756, 0
  %v766 = vsel %vm761, %v753, 0
  %768 = vmatprep.subr.mxu0 0.0
  %769 = vmatpush1.msra.mxu0 0.0
  %770 = vmatprep.subr.mxu0 0.0
  %771 = vmatpush1.msra.mxu0 0.0
  %772 = vmatprep.subr.mxu0 0.0
  %773 = vmatpush1.msra.mxu0 0.0
  %774 = vmatprep.subr.mxu0 0.0
  %775 = vmatpush1.msra.mxu0 0.0
  %776 = vmatprep.subr.mxu0 0.0
  %777 = vmatpush1.msra.mxu0 0.0
  %778 = vmatprep.subr.mxu0 0.0
  %779 = vmatpush1.msra.mxu0 0.0
  %780 = vmatprep.subr.mxu0 0.0
  %781 = vmatpush1.msra.mxu0 0.0
  %782 = vmatprep.subr.mxu0 0.0
  %783 = vmatpush1.msra.mxu0 0.0
  %784 = vmatprep.subr.mxu0 0.0
  %785 = vmatpush1.msra.mxu0 0.0
  %786 = vmatprep.subr.mxu0 0.0
  %787 = vmatpush1.msra.mxu0 0.0
  %788 = vmatprep.subr.mxu0 0.0
  %789 = vmatpush1.msra.mxu0 0.0
  %790 = vmatprep.subr.mxu0 0.0
  %791 = vmatpush1.msra.mxu0 0.0
  %792 = vmatprep.subr.mxu0 0.0
  %793 = vmatpush1.msra.mxu0 0.0
  %794 = vmatprep.subr.mxu0 0.0
  %795 = vmatpush1.msra.mxu0 0.0
  %796 = vmatprep.subr.mxu0 0.0
  %797 = vmatpush1.msra.mxu0 0.0
  %798 = vmatprep.subr.mxu0 %v764
  %799 = vmatpush1.msra.mxu0 %v762
  %800 = vmatprep.subr.mxu0 0.0
  %801 = vmatpush2.msra.mxu0 0.0
  %802 = vmatprep.subr.mxu0 0.0
  %803 = vmatpush2.msra.mxu0 0.0
  %804 = vmatprep.subr.mxu0 0.0
  %805 = vmatpush2.msra.mxu0 0.0
  %806 = vmatprep.subr.mxu0 0.0
  %807 = vmatpush2.msra.mxu0 0.0
  %808 = vmatprep.subr.mxu0 0.0
  %809 = vmatpush2.msra.mxu0 0.0
  %810 = vmatprep.subr.mxu0 0.0
  %811 = vmatpush2.msra.mxu0 0.0
  %812 = vmatprep.subr.mxu0 0.0
  %813 = vmatpush2.msra.mxu0 0.0
  %814 = vmatprep.subr.mxu0 0.0
  %815 = vmatpush2.msra.mxu0 0.0
  %816 = vmatprep.subr.mxu0 0.0
  %817 = vmatpush2.msra.mxu0 0.0
  %818 = vmatprep.subr.mxu0 0.0
  %819 = vmatpush2.msra.mxu0 0.0
  %820 = vmatprep.subr.mxu0 0.0
  %821 = vmatpush2.msra.mxu0 0.0
  %822 = vmatprep.subr.mxu0 0.0
  %823 = vmatpush2.msra.mxu0 0.0
  %824 = vmatprep.subr.mxu0 0.0
  %825 = vmatpush2.msra.mxu0 0.0
  %826 = vmatprep.subr.mxu0 0.0
  %827 = vmatpush2.msra.mxu0 0.0
  %828 = vmatprep.subr.mxu0 0.0
  %829 = vmatpush2.msra.mxu0 0.0
  %830 = vmatprep.subr.mxu0 0.0
  %831 = vmatpush2.msra.mxu0 0.0
  %832 = vmatprep.mubr.f32.mxu0 0.0
  %833 = vmatmul.mubr.f32.gmra.mxu0 %v759
  %v834 = vpop.f32.mrf.mxu0
  %v835 = vadd.f32 0.0, %v834
  %v836 = vpop.f32.mrf.mxu0
  %v837 = vadd.f32 0.0, %v836
  %838 = vdwg.mxu0
  %839 = vmatprep.subr.mxu0 0.0
  %840 = vmatpush1.msra.mxu0 0.0
  %841 = vmatprep.subr.mxu0 0.0
  %842 = vmatpush1.msra.mxu0 0.0
  %843 = vmatprep.subr.mxu0 0.0
  %844 = vmatpush1.msra.mxu0 0.0
  %845 = vmatprep.subr.mxu0 0.0
  %846 = vmatpush1.msra.mxu0 0.0
  %847 = vmatprep.subr.mxu0 0.0
  %848 = vmatpush1.msra.mxu0 0.0
  %849 = vmatprep.subr.mxu0 0.0
  %850 = vmatpush1.msra.mxu0 0.0
  %851 = vmatprep.subr.mxu0 0.0
  %852 = vmatpush1.msra.mxu0 0.0
  %853 = vmatprep.subr.mxu0 0.0
  %854 = vmatpush1.msra.mxu0 0.0
  %855 = vmatprep.subr.mxu0 0.0
  %856 = vmatpush1.msra.mxu0 0.0
  %857 = vmatprep.subr.mxu0 0.0
  %858 = vmatpush1.msra.mxu0 0.0
  %859 = vmatprep.subr.mxu0 0.0
  %860 = vmatpush1.msra.mxu0 0.0
  %861 = vmatprep.subr.mxu0 0.0
  %862 = vmatpush1.msra.mxu0 0.0
  %863 = vmatprep.subr.mxu0 0.0
  %864 = vmatpush1.msra.mxu0 0.0
  %865 = vmatprep.subr.mxu0 0.0
  %866 = vmatpush1.msra.mxu0 0.0
  %867 = vmatprep.subr.mxu0 0.0
  %868 = vmatpush1.msra.mxu0 0.0
  %869 = vmatprep.subr.mxu0 0.0
  %870 = vmatpush1.msra.mxu0 %v766
  %871 = vmatprep.subr.mxu0 0.0
  %872 = vmatpush2.msra.mxu0 0.0
  %873 = vmatprep.subr.mxu0 0.0
  %874 = vmatpush2.msra.mxu0 0.0
  %875 = vmatprep.subr.mxu0 0.0
  %876 = vmatpush2.msra.mxu0 0.0
  %877 = vmatprep.subr.mxu0 0.0
  %878 = vmatpush2.msra.mxu0 0.0
  %879 = vmatprep.subr.mxu0 0.0
  %880 = vmatpush2.msra.mxu0 0.0
  %881 = vmatprep.subr.mxu0 0.0
  %882 = vmatpush2.msra.mxu0 0.0
  %883 = vmatprep.subr.mxu0 0.0
  %884 = vmatpush2.msra.mxu0 0.0
  %885 = vmatprep.subr.mxu0 0.0
  %886 = vmatpush2.msra.mxu0 0.0
  %887 = vmatprep.subr.mxu0 0.0
  %888 = vmatpush2.msra.mxu0 0.0
  %889 = vmatprep.subr.mxu0 0.0
  %890 = vmatpush2.msra.mxu0 0.0
  %891 = vmatprep.subr.mxu0 0.0
  %892 = vmatpush2.msra.mxu0 0.0
  %893 = vmatprep.subr.mxu0 0.0
  %894 = vmatpush2.msra.mxu0 0.0
  %895 = vmatprep.subr.mxu0 0.0
  %896 = vmatpush2.msra.mxu0 0.0
  %897 = vmatprep.subr.mxu0 0.0
  %898 = vmatpush2.msra.mxu0 0.0
  %899 = vmatprep.subr.mxu0 0.0
  %900 = vmatpush2.msra.mxu0 0.0
  %901 = vmatprep.subr.mxu0 0.0
  %902 = vmatpush2.msra.mxu0 0.0
  %903 = vmatprep.mubr.f32.mxu0 0.0
  %904 = vmatmul.mubr.f32.gmra.mxu0 %v759
  %v905 = vpop.f32.mrf.mxu0
  %v906 = vadd.f32 0.0, %v905
  %v907 = vpop.f32.mrf.mxu0
  %908 = vdwg.mxu0
  %v909 = vadd.f32 %v677, %v835
  %v910 = vadd.f32 %v679, %v837
  %v911 = vadd.f32 %v748, %v906
  %v912 = vld [vmem:[%s14] sm:$0x7]
  %v914 = vlaneseq
  %v915 = vshrl.u32 %v914, 7
  %v916 = vsub.s32 0, %v915
  %v917 = vrot.slane %v912, %v916
  %v918 = vlaneseq
  %v919 = vshrl.u32 %v918, 7
  %v920 = vsub.s32 1, %v919
  %v921 = vrot.slane %v912, %v920
  %v922 = vlaneseq
  %v923 = vshrl.u32 %v922, 7
  %v924 = vsub.s32 2, %v923
  %v925 = vrot.slane %v912, %v924
  %v929 = vadd.f32 %v909, %v917
  %v930 = vadd.f32 %v910, %v921
  %v931 = vadd.f32 %v911, %v925
  %v932 = vmax.f32 %v929, 0.0
  %v933 = vmax.f32 %v930, 0.0
  %v934 = vmax.f32 %v931, 0.0
  %v935 = vld [vmem:[%s15] sm:$0xff]
  %v936 = vld [vmem:[%s15 + $0x8] sm:$0xff]
  %v937 = vld [vmem:[%s15 + $0x10] sm:$0xff]
  %v938 = vld [vmem:[%s15 + $0x18] sm:$0xff]
  %v939 = vld [vmem:[%s15 + $0x20] sm:$0xff]
  %v940 = vld [vmem:[%s15 + $0x28] sm:$0xff]
  %v941 = vld [vmem:[%s15 + $0x30] sm:$0xff]
  %v942 = vld [vmem:[%s15 + $0x38] sm:$0xff]
  %v943 = vld [vmem:[%s15 + $0x40] sm:$0xff]
  %v944 = vld [vmem:[%s15 + $0x48] sm:$0xff]
  %v945 = vld [vmem:[%s15 + $0x50] sm:$0xff]
  %v946 = vld [vmem:[%s15 + $0x58] sm:$0xff]
  %v947 = vld [vmem:[%s15 + $0x60] sm:$0xff]
  %v948 = vld [vmem:[%s15 + $0x68] sm:$0xff]
  %v949 = vld [vmem:[%s15 + $0x70] sm:$0xff]
  %v950 = vld [vmem:[%s15 + $0x78] sm:$0xff]
  %v951 = vld [vmem:[%s15 + $0x80] sm:$0xff]
  %v952 = vld [vmem:[%s15 + $0x88] sm:$0xff]
  %v953 = vld [vmem:[%s15 + $0x90] sm:$0xff]
  %v954 = vld [vmem:[%s15 + $0x98] sm:$0xff]
  %v955 = vld [vmem:[%s15 + $0xa0] sm:$0xff]
  %v956 = vld [vmem:[%s15 + $0xa8] sm:$0xff]
  %v957 = vld [vmem:[%s15 + $0xb0] sm:$0xff]
  %v958 = vld [vmem:[%s15 + $0xb8] sm:$0xff]
  %v959 = vld [vmem:[%s15 + $0xc0] sm:$0xff]
  %v960 = vld [vmem:[%s15 + $0xc8] sm:$0xff]
  %v961 = vld [vmem:[%s15 + $0xd0] sm:$0xff]
  %v962 = vld [vmem:[%s15 + $0xd8] sm:$0xff]
  %v963 = vld [vmem:[%s15 + $0xe0] sm:$0xff]
  %v964 = vld [vmem:[%s15 + $0xe8] sm:$0xff]
  %v965 = vld [vmem:[%s15 + $0xf0] sm:$0xff]
  %v966 = vld [vmem:[%s15 + $0xf8] sm:$0xff]
  %v967 = vld [vmem:[%s15 + $0x100] sm:$0xff]
  %v968 = vld [vmem:[%s15 + $0x108] sm:$0xff]
  %v969 = vld [vmem:[%s15 + $0x110] sm:$0xff]
  %v970 = vld [vmem:[%s15 + $0x118] sm:$0xff]
  %v971 = vld [vmem:[%s15 + $0x120] sm:$0xff]
  %v972 = vld [vmem:[%s15 + $0x128] sm:$0xff]
  %v973 = vld [vmem:[%s15 + $0x130] sm:$0xff]
  %v974 = vld [vmem:[%s15 + $0x138] sm:$0xff]
  %v975 = vld [vmem:[%s15 + $0x140] sm:$0xff]
  %v976 = vld [vmem:[%s15 + $0x148] sm:$0xff]
  %v977 = vld [vmem:[%s15 + $0x150] sm:$0xff]
  %v978 = vld [vmem:[%s15 + $0x158] sm:$0xff]
  %v979 = vld [vmem:[%s15 + $0x160] sm:$0xff]
  %v980 = vld [vmem:[%s15 + $0x168] sm:$0xff]
  %v981 = vld [vmem:[%s15 + $0x170] sm:$0xff]
  %v982 = vld [vmem:[%s15 + $0x178] sm:$0xff]
  %v983 = vld [vmem:[%s15 + $0x180] sm:$0xff]
  %v984 = vld [vmem:[%s15 + $0x188] sm:$0xff]
  %v985 = vld [vmem:[%s15 + $0x190] sm:$0xff]
  %v986 = vld [vmem:[%s15 + $0x198] sm:$0xff]
  %v987 = vld [vmem:[%s15 + $0x1a0] sm:$0xff]
  %v988 = vld [vmem:[%s15 + $0x1a8] sm:$0xff]
  %v989 = vld [vmem:[%s15 + $0x1b0] sm:$0xff]
  %v990 = vld [vmem:[%s15 + $0x1b8] sm:$0xff]
  %v991 = vld [vmem:[%s15 + $0x1c0] sm:$0xff]
  %v992 = vld [vmem:[%s15 + $0x1c8] sm:$0xff]
  %v993 = vld [vmem:[%s15 + $0x1d0] sm:$0xff]
  %v994 = vld [vmem:[%s15 + $0x1d8] sm:$0xff]
  %v995 = vld [vmem:[%s15 + $0x1e0] sm:$0xff]
  %v996 = vld [vmem:[%s15 + $0x1e8] sm:$0xff]
  %v997 = vld [vmem:[%s15 + $0x1f0] sm:$0xff]
  %v998 = vld [vmem:[%s15 + $0x1f8] sm:$0xff]
  %v999 = vld [vmem:[%s15 + $0x200] sm:$0xff]
  %v1000 = vld [vmem:[%s15 + $0x208] sm:$0xff]
  %v1001 = vld [vmem:[%s15 + $0x210] sm:$0xff]
  %v1002 = vld [vmem:[%s15 + $0x218] sm:$0xff]
  %v1003 = vld [vmem:[%s15 + $0x220] sm:$0xff]
  %v1004 = vld [vmem:[%s15 + $0x228] sm:$0xff]
  %v1005 = vld [vmem:[%s15 + $0x230] sm:$0xff]
  %v1006 = vld [vmem:[%s15 + $0x238] sm:$0xff]
  %v1007 = vld [vmem:[%s15 + $0x240] sm:$0xff]
  %v1008 = vld [vmem:[%s15 + $0x248] sm:$0xff]
  %v1009 = vld [vmem:[%s15 + $0x250] sm:$0xff]
  %v1010 = vld [vmem:[%s15 + $0x258] sm:$0xff]
  %v1011 = vld [vmem:[%s15 + $0x260] sm:$0xff]
  %v1012 = vld [vmem:[%s15 + $0x268] sm:$0xff]
  %v1013 = vld [vmem:[%s15 + $0x270] sm:$0xff]
  %v1014 = vld [vmem:[%s15 + $0x278] sm:$0xff]
  %v1015 = vld [vmem:[%s15 + $0x280] sm:$0xff]
  %v1016 = vld [vmem:[%s15 + $0x288] sm:$0xff]
  %v1017 = vld [vmem:[%s15 + $0x290] sm:$0xff]
  %v1018 = vld [vmem:[%s15 + $0x298] sm:$0xff]
  %v1019 = vld [vmem:[%s15 + $0x2a0] sm:$0xff]
  %v1020 = vld [vmem:[%s15 + $0x2a8] sm:$0xff]
  %v1021 = vld [vmem:[%s15 + $0x2b0] sm:$0xff]
  %v1022 = vld [vmem:[%s15 + $0x2b8] sm:$0xff]
  %v1023 = vld [vmem:[%s15 + $0x2c0] sm:$0xff]
  %v1024 = vld [vmem:[%s15 + $0x2c8] sm:$0xff]
  %v1025 = vld [vmem:[%s15 + $0x2d0] sm:$0xff]
  %v1026 = vld [vmem:[%s15 + $0x2d8] sm:$0xff]
  %v1027 = vld [vmem:[%s15 + $0x2e0] sm:$0xff]
  %v1028 = vld [vmem:[%s15 + $0x2e8] sm:$0xff]
  %v1029 = vld [vmem:[%s15 + $0x2f0] sm:$0xff]
  %v1030 = vld [vmem:[%s15 + $0x2f8] sm:$0xff]
  %v1031 = vld [vmem:[%s16] sm:$0x3]
  %v1033 = vlaneseq
  %v1034 = vshrl.u32 %v1033, 7
  %v1035 = vsub.s32 0, %v1034
  %v1036 = vrot.slane %v1031, %v1035
  %v1037 = vlaneseq
  %v1038 = vshrl.u32 %v1037, 7
  %v1039 = vsub.s32 1, %v1038
  %v1040 = vrot.slane %v1031, %v1039
  %1043 = vmatprep.subr.mxu0 %v966
  %1044 = vmatpush1.msra.mxu0 %v965
  %1045 = vmatprep.subr.mxu0 %v964
  %1046 = vmatpush1.msra.mxu0 %v963
  %1047 = vmatprep.subr.mxu0 %v962
  %1048 = vmatpush1.msra.mxu0 %v961
  %1049 = vmatprep.subr.mxu0 %v960
  %1050 = vmatpush1.msra.mxu0 %v959
  %1051 = vmatprep.subr.mxu0 %v958
  %1052 = vmatpush1.msra.mxu0 %v957
  %1053 = vmatprep.subr.mxu0 %v956
  %1054 = vmatpush1.msra.mxu0 %v955
  %1055 = vmatprep.subr.mxu0 %v954
  %1056 = vmatpush1.msra.mxu0 %v953
  %1057 = vmatprep.subr.mxu0 %v952
  %1058 = vmatpush1.msra.mxu0 %v951
  %1059 = vmatprep.subr.mxu0 %v950
  %1060 = vmatpush1.msra.mxu0 %v949
  %1061 = vmatprep.subr.mxu0 %v948
  %1062 = vmatpush1.msra.mxu0 %v947
  %1063 = vmatprep.subr.mxu0 %v946
  %1064 = vmatpush1.msra.mxu0 %v945
  %1065 = vmatprep.subr.mxu0 %v944
  %1066 = vmatpush1.msra.mxu0 %v943
  %1067 = vmatprep.subr.mxu0 %v942
  %1068 = vmatpush1.msra.mxu0 %v941
  %1069 = vmatprep.subr.mxu0 %v940
  %1070 = vmatpush1.msra.mxu0 %v939
  %1071 = vmatprep.subr.mxu0 %v938
  %1072 = vmatpush1.msra.mxu0 %v937
  %1073 = vmatprep.subr.mxu0 %v936
  %1074 = vmatpush1.msra.mxu0 %v935
  %1075 = vmatprep.subr.mxu0 %v998
  %1076 = vmatpush2.msra.mxu0 %v997
  %1077 = vmatprep.subr.mxu0 %v996
  %1078 = vmatpush2.msra.mxu0 %v995
  %1079 = vmatprep.subr.mxu0 %v994
  %1080 = vmatpush2.msra.mxu0 %v993
  %1081 = vmatprep.subr.mxu0 %v992
  %1082 = vmatpush2.msra.mxu0 %v991
  %1083 = vmatprep.subr.mxu0 %v990
  %1084 = vmatpush2.msra.mxu0 %v989
  %1085 = vmatprep.subr.mxu0 %v988
  %1086 = vmatpush2.msra.mxu0 %v987
  %1087 = vmatprep.subr.mxu0 %v986
  %1088 = vmatpush2.msra.mxu0 %v985
  %1089 = vmatprep.subr.mxu0 %v984
  %1090 = vmatpush2.msra.mxu0 %v983
  %1091 = vmatprep.subr.mxu0 %v982
  %1092 = vmatpush2.msra.mxu0 %v981
  %1093 = vmatprep.subr.mxu0 %v980
  %1094 = vmatpush2.msra.mxu0 %v979
  %1095 = vmatprep.subr.mxu0 %v978
  %1096 = vmatpush2.msra.mxu0 %v977
  %1097 = vmatprep.subr.mxu0 %v976
  %1098 = vmatpush2.msra.mxu0 %v975
  %1099 = vmatprep.subr.mxu0 %v974
  %1100 = vmatpush2.msra.mxu0 %v973
  %1101 = vmatprep.subr.mxu0 %v972
  %1102 = vmatpush2.msra.mxu0 %v971
  %1103 = vmatprep.subr.mxu0 %v970
  %1104 = vmatpush2.msra.mxu0 %v969
  %1105 = vmatprep.subr.mxu0 %v968
  %1106 = vmatpush2.msra.mxu0 %v967
  %1107 = vmatprep.mubr.f32.mxu0 %v933
  %1108 = vmatmul.mubr.f32.gmra.mxu0 %v932
  %v1109 = vpop.f32.mrf.mxu0
  %v1110 = vadd.f32 %v1036, %v1109
  %v1111 = vpop.f32.mrf.mxu0
  %v1112 = vadd.f32 %v1040, %v1111
  %1113 = vdwg.mxu0
  %1114 = vmatprep.subr.mxu0 %v1030
  %1115 = vmatpush1.msra.mxu0 %v1029
  %1116 = vmatprep.subr.mxu0 %v1028
  %1117 = vmatpush1.msra.mxu0 %v1027
  %1118 = vmatprep.subr.mxu0 %v1026
  %1119 = vmatpush1.msra.mxu0 %v1025
  %1120 = vmatprep.subr.mxu0 %v1024
  %1121 = vmatpush1.msra.mxu0 %v1023
  %1122 = vmatprep.subr.mxu0 %v1022
  %1123 = vmatpush1.msra.mxu0 %v1021
  %1124 = vmatprep.subr.mxu0 %v1020
  %1125 = vmatpush1.msra.mxu0 %v1019
  %1126 = vmatprep.subr.mxu0 %v1018
  %1127 = vmatpush1.msra.mxu0 %v1017
  %1128 = vmatprep.subr.mxu0 %v1016
  %1129 = vmatpush1.msra.mxu0 %v1015
  %1130 = vmatprep.subr.mxu0 %v1014
  %1131 = vmatpush1.msra.mxu0 %v1013
  %1132 = vmatprep.subr.mxu0 %v1012
  %1133 = vmatpush1.msra.mxu0 %v1011
  %1134 = vmatprep.subr.mxu0 %v1010
  %1135 = vmatpush1.msra.mxu0 %v1009
  %1136 = vmatprep.subr.mxu0 %v1008
  %1137 = vmatpush1.msra.mxu0 %v1007
  %1138 = vmatprep.subr.mxu0 %v1006
  %1139 = vmatpush1.msra.mxu0 %v1005
  %1140 = vmatprep.subr.mxu0 %v1004
  %1141 = vmatpush1.msra.mxu0 %v1003
  %1142 = vmatprep.subr.mxu0 %v1002
  %1143 = vmatpush1.msra.mxu0 %v1001
  %1144 = vmatprep.subr.mxu0 %v1000
  %1145 = vmatpush1.msra.mxu0 %v999
  %1146 = vmatprep.subr.mxu0 0.0
  %1147 = vmatpush2.msra.mxu0 0.0
  %1148 = vmatprep.subr.mxu0 0.0
  %1149 = vmatpush2.msra.mxu0 0.0
  %1150 = vmatprep.subr.mxu0 0.0
  %1151 = vmatpush2.msra.mxu0 0.0
  %1152 = vmatprep.subr.mxu0 0.0
  %1153 = vmatpush2.msra.mxu0 0.0
  %1154 = vmatprep.subr.mxu0 0.0
  %1155 = vmatpush2.msra.mxu0 0.0
  %1156 = vmatprep.subr.mxu0 0.0
  %1157 = vmatpush2.msra.mxu0 0.0
  %1158 = vmatprep.subr.mxu0 0.0
  %1159 = vmatpush2.msra.mxu0 0.0
  %1160 = vmatprep.subr.mxu0 0.0
  %1161 = vmatpush2.msra.mxu0 0.0
  %1162 = vmatprep.subr.mxu0 0.0
  %1163 = vmatpush2.msra.mxu0 0.0
  %1164 = vmatprep.subr.mxu0 0.0
  %1165 = vmatpush2.msra.mxu0 0.0
  %1166 = vmatprep.subr.mxu0 0.0
  %1167 = vmatpush2.msra.mxu0 0.0
  %1168 = vmatprep.subr.mxu0 0.0
  %1169 = vmatpush2.msra.mxu0 0.0
  %1170 = vmatprep.subr.mxu0 0.0
  %1171 = vmatpush2.msra.mxu0 0.0
  %1172 = vmatprep.subr.mxu0 0.0
  %1173 = vmatpush2.msra.mxu0 0.0
  %1174 = vmatprep.subr.mxu0 0.0
  %1175 = vmatpush2.msra.mxu0 0.0
  %1176 = vmatprep.subr.mxu0 0.0
  %1177 = vmatpush2.msra.mxu0 0.0
  %1178 = vmatprep.mubr.f32.mxu0 0.0
  %1179 = vmatmul.mubr.f32.gmra.mxu0 %v934
  %v1180 = vpop.f32.mrf.mxu0
  %v1181 = vadd.f32 %v1110, %v1180
  %v1182 = vpop.f32.mrf.mxu0
  %v1183 = vadd.f32 %v1112, %v1182
  %1184 = vdwg.mxu0
  %v1185 = vmax.f32 %v1181, 0.0
  %v1186 = vmax.f32 %v1183, 0.0
  %v1187 = vld [vmem:[%s17] sm:$0xff]
  %v1188 = vld [vmem:[%s17 + $0x8] sm:$0xff]
  %v1189 = vld [vmem:[%s17 + $0x10] sm:$0xff]
  %v1190 = vld [vmem:[%s17 + $0x18] sm:$0xff]
  %v1191 = vld [vmem:[%s17 + $0x20] sm:$0xff]
  %v1192 = vld [vmem:[%s17 + $0x28] sm:$0xff]
  %v1193 = vld [vmem:[%s17 + $0x30] sm:$0xff]
  %v1194 = vld [vmem:[%s17 + $0x38] sm:$0xff]
  %v1195 = vld [vmem:[%s17 + $0x40] sm:$0xff]
  %v1196 = vld [vmem:[%s17 + $0x48] sm:$0xff]
  %v1197 = vld [vmem:[%s17 + $0x50] sm:$0xff]
  %v1198 = vld [vmem:[%s17 + $0x58] sm:$0xff]
  %v1199 = vld [vmem:[%s17 + $0x60] sm:$0xff]
  %v1200 = vld [vmem:[%s17 + $0x68] sm:$0xff]
  %v1201 = vld [vmem:[%s17 + $0x70] sm:$0xff]
  %v1202 = vld [vmem:[%s17 + $0x78] sm:$0xff]
  %v1203 = vld [vmem:[%s17 + $0x80] sm:$0xff]
  %v1204 = vld [vmem:[%s17 + $0x88] sm:$0xff]
  %v1205 = vld [vmem:[%s17 + $0x90] sm:$0xff]
  %v1206 = vld [vmem:[%s17 + $0x98] sm:$0xff]
  %v1207 = vld [vmem:[%s17 + $0xa0] sm:$0xff]
  %v1208 = vld [vmem:[%s17 + $0xa8] sm:$0xff]
  %v1209 = vld [vmem:[%s17 + $0xb0] sm:$0xff]
  %v1210 = vld [vmem:[%s17 + $0xb8] sm:$0xff]
  %v1211 = vld [vmem:[%s18] sm:$0x1]
  %v1213 = vlaneseq
  %v1214 = vshrl.u32 %v1213, 7
  %v1215 = vsub.s32 0, %v1214
  %v1216 = vrot.slane %v1211, %v1215
  %v1219 = vsel %vm266, %v1186, 0
  %1221 = vmatprep.subr.mxu0 0.0
  %1222 = vmatpush1.msra.mxu0 %v1202
  %1223 = vmatprep.subr.mxu0 0.0
  %1224 = vmatpush1.msra.mxu0 %v1201
  %1225 = vmatprep.subr.mxu0 0.0
  %1226 = vmatpush1.msra.mxu0 %v1200
  %1227 = vmatprep.subr.mxu0 0.0
  %1228 = vmatpush1.msra.mxu0 %v1199
  %1229 = vmatprep.subr.mxu0 0.0
  %1230 = vmatpush1.msra.mxu0 %v1198
  %1231 = vmatprep.subr.mxu0 0.0
  %1232 = vmatpush1.msra.mxu0 %v1197
  %1233 = vmatprep.subr.mxu0 0.0
  %1234 = vmatpush1.msra.mxu0 %v1196
  %1235 = vmatprep.subr.mxu0 0.0
  %1236 = vmatpush1.msra.mxu0 %v1195
  %1237 = vmatprep.subr.mxu0 0.0
  %1238 = vmatpush1.msra.mxu0 %v1194
  %1239 = vmatprep.subr.mxu0 0.0
  %1240 = vmatpush1.msra.mxu0 %v1193
  %1241 = vmatprep.subr.mxu0 0.0
  %1242 = vmatpush1.msra.mxu0 %v1192
  %1243 = vmatprep.subr.mxu0 0.0
  %1244 = vmatpush1.msra.mxu0 %v1191
  %1245 = vmatprep.subr.mxu0 0.0
  %1246 = vmatpush1.msra.mxu0 %v1190
  %1247 = vmatprep.subr.mxu0 0.0
  %1248 = vmatpush1.msra.mxu0 %v1189
  %1249 = vmatprep.subr.mxu0 0.0
  %1250 = vmatpush1.msra.mxu0 %v1188
  %1251 = vmatprep.subr.mxu0 0.0
  %1252 = vmatpush1.msra.mxu0 %v1187
  %1253 = vmatprep.subr.mxu0 0.0
  %1254 = vmatpush2.msra.mxu0 0.0
  %1255 = vmatprep.subr.mxu0 0.0
  %1256 = vmatpush2.msra.mxu0 0.0
  %1257 = vmatprep.subr.mxu0 0.0
  %1258 = vmatpush2.msra.mxu0 0.0
  %1259 = vmatprep.subr.mxu0 0.0
  %1260 = vmatpush2.msra.mxu0 0.0
  %1261 = vmatprep.subr.mxu0 0.0
  %1262 = vmatpush2.msra.mxu0 0.0
  %1263 = vmatprep.subr.mxu0 0.0
  %1264 = vmatpush2.msra.mxu0 0.0
  %1265 = vmatprep.subr.mxu0 0.0
  %1266 = vmatpush2.msra.mxu0 0.0
  %1267 = vmatprep.subr.mxu0 0.0
  %1268 = vmatpush2.msra.mxu0 0.0
  %1269 = vmatprep.subr.mxu0 0.0
  %1270 = vmatpush2.msra.mxu0 %v1210
  %1271 = vmatprep.subr.mxu0 0.0
  %1272 = vmatpush2.msra.mxu0 %v1209
  %1273 = vmatprep.subr.mxu0 0.0
  %1274 = vmatpush2.msra.mxu0 %v1208
  %1275 = vmatprep.subr.mxu0 0.0
  %1276 = vmatpush2.msra.mxu0 %v1207
  %1277 = vmatprep.subr.mxu0 0.0
  %1278 = vmatpush2.msra.mxu0 %v1206
  %1279 = vmatprep.subr.mxu0 0.0
  %1280 = vmatpush2.msra.mxu0 %v1205
  %1281 = vmatprep.subr.mxu0 0.0
  %1282 = vmatpush2.msra.mxu0 %v1204
  %1283 = vmatprep.subr.mxu0 0.0
  %1284 = vmatpush2.msra.mxu0 %v1203
  %1285 = vmatprep.mubr.f32.mxu0 %v1219
  %1286 = vmatmul.mubr.f32.gmra.mxu0 %v1185
  %v1287 = vpop.f32.mrf.mxu0
  %v1288 = vadd.f32 %v1216, %v1287
  %v1289 = vpop.f32.mrf.mxu0
  %1290 = vdwg.mxu0
  %v1291 = vmax.f32 %v1288, 0.0
  %v1292 = vld [vmem:[%s19] sm:$0xff]
  %v1293 = vld [vmem:[%s19 + $0x8] sm:$0xff]
  %v1294 = vld [vmem:[%s19 + $0x10] sm:$0xff]
  %v1295 = vld [vmem:[%s19 + $0x18] sm:$0xff]
  %v1296 = vld [vmem:[%s19 + $0x20] sm:$0xff]
  %v1297 = vld [vmem:[%s19 + $0x28] sm:$0xff]
  %v1298 = vld [vmem:[%s19 + $0x30] sm:$0xff]
  %v1299 = vld [vmem:[%s19 + $0x38] sm:$0xff]
  %v1300 = vld [vmem:[%s19 + $0x40] sm:$0xff]
  %v1301 = vld [vmem:[%s19 + $0x48] sm:$0xff]
  %v1302 = vld [vmem:[%s19 + $0x50] sm:$0xff]
  %v1303 = vld [vmem:[%s19 + $0x58] sm:$0xff]
  %v1304 = vld [vmem:[#allocation2] sm:$0x1]
  %v1306 = vlaneseq
  %v1307 = vshrl.u32 %v1306, 7
  %v1308 = vsub.s32 0, %v1307
  %v1309 = vrot.slane %v1304, %v1308
  %vm1311 = vcmask 785408
  %v1313 = vsel %vm1311, %v1291, 0
  %1315 = vmatprep.subr.mxu0 0.0
  %1316 = vmatpush1.msra.mxu0 0.0
  %1317 = vmatprep.subr.mxu0 0.0
  %1318 = vmatpush1.msra.mxu0 0.0
  %1319 = vmatprep.subr.mxu0 0.0
  %1320 = vmatpush1.msra.mxu0 0.0
  %1321 = vmatprep.subr.mxu0 0.0
  %1322 = vmatpush1.msra.mxu0 0.0
  %1323 = vmatprep.subr.mxu0 0.0
  %1324 = vmatpush1.msra.mxu0 %v1303
  %1325 = vmatprep.subr.mxu0 0.0
  %1326 = vmatpush1.msra.mxu0 %v1302
  %1327 = vmatprep.subr.mxu0 0.0
  %1328 = vmatpush1.msra.mxu0 %v1301
  %1329 = vmatprep.subr.mxu0 0.0
  %1330 = vmatpush1.msra.mxu0 %v1300
  %1331 = vmatprep.subr.mxu0 0.0
  %1332 = vmatpush1.msra.mxu0 %v1299
  %1333 = vmatprep.subr.mxu0 0.0
  %1334 = vmatpush1.msra.mxu0 %v1298
  %1335 = vmatprep.subr.mxu0 0.0
  %1336 = vmatpush1.msra.mxu0 %v1297
  %1337 = vmatprep.subr.mxu0 0.0
  %1338 = vmatpush1.msra.mxu0 %v1296
  %1339 = vmatprep.subr.mxu0 0.0
  %1340 = vmatpush1.msra.mxu0 %v1295
  %1341 = vmatprep.subr.mxu0 0.0
  %1342 = vmatpush1.msra.mxu0 %v1294
  %1343 = vmatprep.subr.mxu0 0.0
  %1344 = vmatpush1.msra.mxu0 %v1293
  %1345 = vmatprep.subr.mxu0 0.0
  %1346 = vmatpush1.msra.mxu0 %v1292
  %1347 = vmatprep.subr.mxu0 0.0
  %1348 = vmatpush2.msra.mxu0 0.0
  %1349 = vmatprep.subr.mxu0 0.0
  %1350 = vmatpush2.msra.mxu0 0.0
  %1351 = vmatprep.subr.mxu0 0.0
  %1352 = vmatpush2.msra.mxu0 0.0
  %1353 = vmatprep.subr.mxu0 0.0
  %1354 = vmatpush2.msra.mxu0 0.0
  %1355 = vmatprep.subr.mxu0 0.0
  %1356 = vmatpush2.msra.mxu0 0.0
  %1357 = vmatprep.subr.mxu0 0.0
  %1358 = vmatpush2.msra.mxu0 0.0
  %1359 = vmatprep.subr.mxu0 0.0
  %1360 = vmatpush2.msra.mxu0 0.0
  %1361 = vmatprep.subr.mxu0 0.0
  %1362 = vmatpush2.msra.mxu0 0.0
  %1363 = vmatprep.subr.mxu0 0.0
  %1364 = vmatpush2.msra.mxu0 0.0
  %1365 = vmatprep.subr.mxu0 0.0
  %1366 = vmatpush2.msra.mxu0 0.0
  %1367 = vmatprep.subr.mxu0 0.0
  %1368 = vmatpush2.msra.mxu0 0.0
  %1369 = vmatprep.subr.mxu0 0.0
  %1370 = vmatpush2.msra.mxu0 0.0
  %1371 = vmatprep.subr.mxu0 0.0
  %1372 = vmatpush2.msra.mxu0 0.0
  %1373 = vmatprep.subr.mxu0 0.0
  %1374 = vmatpush2.msra.mxu0 0.0
  %1375 = vmatprep.subr.mxu0 0.0
  %1376 = vmatpush2.msra.mxu0 0.0
  %1377 = vmatprep.subr.mxu0 0.0
  %1378 = vmatpush2.msra.mxu0 0.0
  %1379 = vmatprep.mubr.f32.mxu0 0.0
  %1380 = vmatmul.mubr.f32.gmra.mxu0 %v1313
  %v1381 = vpop.f32.mrf.mxu0
  %v1382 = vadd.f32 %v1309, %v1381
  %v1383 = vpop.f32.mrf.mxu0
  %1384 = vdwg.mxu0
  %1385 = vst.msk [vmem:[%s22] sm:$0xff] %vm445, %v1382
  // Predicated region
  $region86: #{retraining_model_forward.1} parent=0 // pred_check
    _
  $region87: #{retraining_model_forward.1} parent=0 // pred_check_branch
    %1387 = sbr.rel (0) target = $region89
  $region88: #{retraining_model_forward.1} parent=0 // pred_region
    _
  $region89: #{retraining_model_forward.1} parent=0 // pred_fallthru
    _
  // Predicated region
  $region90: #{retraining_model_forward.1} parent=0 // pred_check
    _
  $region91: #{retraining_model_forward.1} parent=0 // pred_check_branch
    %1389 = sbr.rel (0) target = $region93
  $region92: #{retraining_model_forward.1} parent=0 // pred_region
    _
  $region93: #{retraining_model_forward.1} parent=0 // pred_fallthru
    _
  // Predicated region
  $region94: #{retraining_model_forward.1} parent=0 // pred_check
    _
  $region95: #{retraining_model_forward.1} parent=0 // pred_check_branch
    %1391 = sbr.rel (0) target = $region97
  $region96: #{retraining_model_forward.1} parent=0 // pred_region
    _
  $region97: #{retraining_model_forward.1} parent=0 // pred_fallthru
    _
  // Predicated region
  $region98: #{retraining_model_forward.1} parent=0 // pred_check
    _
  $region99: #{retraining_model_forward.1} parent=0 // pred_check_branch
    %1393 = sbr.rel (0) target = $region101
  $region100: #{retraining_model_forward.1} parent=0 // pred_region
    _
  $region101: #{retraining_model_forward.1} parent=0 // pred_fallthru
    _

</llo_original>
